<compile_context>
chip_gen: v7x
topology: tpu7x:2x2x1
jax: 0.10.0
libtpu: 0.0.40
codegen_flags: <defaults>
</compile_context>

<pallas_src>
import math
import jax
import jax.numpy as jnp
from jax.experimental import pallas as pl
from jax.experimental.pallas import tpu as pltpu  # noqa: F401  (TPU backend)

# ---- model config (small, consistent with Layer's forward) ----
B, S, D = 2, 8, 32
BS = B * S
NUM_HEADS = 4
HEAD_DIM = D // NUM_HEADS
MLP_HIDDEN_MULT = 3
HIDDEN = int(D * MLP_HIDDEN_MULT * 2 / 3)        # 64
ATTN_SCALE = HEAD_DIM ** 0.5                     # SelfAttention.scale
SQK_MULT = math.sqrt(D)                          # s_qk_init / s_qk_scale
MLP_SCALE = math.sqrt(D)                         # MLP.scale
NEG_INF = -1e30

# ---- constant-slab layout (row offsets, all 8-aligned, data starts col 0) ----
ROW_WQKV = 0          # (D, 3D)        = (32, 96)
ROW_WUPGATE = 32      # (D, 2*HIDDEN)  = (32, 128)
ROW_R2 = 64           # (2D, 2D)       = (64, 64)   RoPE signed permutation
ROW_WDOWN = 128       # (HIDDEN, D)    = (64, 32)
ROW_IND2 = 192        # (2D, 2H)       = (64, 8)    per-head sum-of-squares indicator
ROW_COS2 = 256        # (BS, 2D)       = (16, 64)
ROW_SIN2 = 272        # (BS, 2D)       = (16, 64)
ROW_EXP2 = 288        # (2H, 2D)       = (8, 64)    ind2.T * sqk_eff * sqrt(attn_scale)
ROW_WO = 296          # (D, D)         = (32, 32)
ROW_BIAS = 328        # (BS, BS)       = (16, 16)   causal + same-batch additive bias
ROW_AA = 344          # (1, D)
ROW_AM = 352          # (1, D)
SLAB_ROWS, SLAB_COLS = 360, 128


def layer_kernel(h_ref, w_ref, o_ref):
    x = h_ref[...]                                                 # (BS, D) f32

    # ---- static slices of the fused constant slab ----
    wqkv = w_ref[ROW_WQKV:ROW_WQKV + D, 0:3 * D]
    wupg = w_ref[ROW_WUPGATE:ROW_WUPGATE + D, 0:2 * HIDDEN]
    r2 = w_ref[ROW_R2:ROW_R2 + 2 * D, 0:2 * D]
    wdn = w_ref[ROW_WDOWN:ROW_WDOWN + HIDDEN, 0:D]
    ind2 = w_ref[ROW_IND2:ROW_IND2 + 2 * D, 0:2 * NUM_HEADS]
    cos2 = w_ref[ROW_COS2:ROW_COS2 + BS, 0:2 * D]
    sin2 = w_ref[ROW_SIN2:ROW_SIN2 + BS, 0:2 * D]
    exp2 = w_ref[ROW_EXP2:ROW_EXP2 + 2 * NUM_HEADS, 0:2 * D]
    wo = w_ref[ROW_WO:ROW_WO + D, 0:D]
    bias = w_ref[ROW_BIAS:ROW_BIAS + BS, 0:BS]
    aA = w_ref[ROW_AA:ROW_AA + 1, 0:D]
    aM = w_ref[ROW_AM:ROW_AM + 1, 0:D]

    # ---------------- fused QKV projection (one matmul) ----------------
    qkv = jnp.dot(x, wqkv, preferred_element_type=jnp.float32)    # (BS, 3D)
    qk = qkv[:, 0:2 * D]                                          # (BS, 2D) fused q|k
    v = qkv[:, 2 * D:3 * D]                                       # (BS, D)

    # ---- RoPE in lane-dense layout: t*cos + (t @ R)*sin (MXU rotation) ----
    qk_rot = qk * cos2 + jnp.dot(qk, r2, preferred_element_type=jnp.float32) * sin2

    # ---- per-head cosine norm + (s_qk*sqrt(D)*sqrt(scale)) via indicator matmuls ----
    ss = jnp.dot(qk_rot * qk_rot, ind2,
                 preferred_element_type=jnp.float32)              # (BS, 2H)
    inv = jax.lax.rsqrt(jnp.maximum(ss, 1e-12))                   # (BS, 2H)
    qk_n = qk_rot * jnp.dot(inv, exp2,
                            preferred_element_type=jnp.float32)   # (BS, 2D)

    # ---- form head-batched tensors ONCE (single reshape+transpose each) ----
    qh = jnp.transpose(qk_n[:, 0:D].reshape(BS, NUM_HEADS, HEAD_DIM), (1, 0, 2))
    kh = jnp.transpose(qk_n[:, D:2 * D].reshape(BS, NUM_HEADS, HEAD_DIM), (1, 0, 2))
    vh = jnp.transpose(v.reshape(BS, NUM_HEADS, HEAD_DIM), (1, 0, 2))

    # ---------------- attention (attn_scale already folded into q,k) ----------------
    logits = jnp.einsum('hqd,hkd->hqk', qh, kh,
                        preferred_element_type=jnp.float32)       # (H, BS, BS)
    logits = logits + bias[None, :, :]                            # causal + same-batch
    m = jnp.max(logits, axis=-1, keepdims=True)
    p = jnp.exp(logits - m)
    denom = jnp.sum(p, axis=-1, keepdims=True)                    # (H, BS, 1)
    ctx = jnp.einsum('hqk,hkd->hqd', p, vh,
                     preferred_element_type=jnp.float32)          # (H, BS, Hd)
    ctx = ctx * pl.reciprocal(denom, approx=False)                # normalize after PV

    attn = jnp.transpose(ctx, (1, 0, 2)).reshape(BS, D)           # single recombine
    attn = jnp.dot(attn, wo, preferred_element_type=jnp.float32)

    def cos_norm(t):                                              # norm over full D
        s2 = jnp.sum(t * t, axis=-1, keepdims=True)
        return t * jax.lax.rsqrt(jnp.maximum(s2, 1e-12))

    # ---------------- residual 1 (nGPT-style) ----------------
    h1 = cos_norm(x + aA * (cos_norm(attn) - x))

    # ---------------- gated MLP (fused up/gate, 128-lane dense) ----------------
    ug = jnp.dot(h1, wupg, preferred_element_type=jnp.float32)    # (BS, 2*HIDDEN)
    u = ug[:, 0:HIDDEN]                                           # s_u pre-folded
    g = ug[:, HIDDEN:2 * HIDDEN]                                  # s_v*sqrt(D) pre-folded
    hidden = u * (g * jax.nn.sigmoid(g))                          # u * silu(g)
    mlp = jnp.dot(hidden, wdn, preferred_element_type=jnp.float32)

    # ---------------- residual 2 ----------------
    h2 = cos_norm(h1 + aM * (cos_norm(mlp) - h1))
    o_ref[...] = h2.astype(o_ref.dtype)


def build_constants(params, cos, sin, Bsz=B, S_=S):
    """One-time fusion of all weights / tables into a single (360,128) slab."""
    wq, wk, wv, wo, sqk, wup, wgate, wdown, su, sv, aA, aM = params
    D_ = wq.shape[0]

    wqkv = jnp.concatenate([wq, wk, wv], axis=1)                       # (D, 3D)
    wupgate = jnp.concatenate(
        [wup * su.reshape(1, -1),
         wgate * (sv.reshape(1, -1) * MLP_SCALE)], axis=1)             # (D, 2*HIDDEN)

    # RoPE half-rotation as a signed permutation per head, duplicated for q|k.
    half = HEAD_DIM // 2
    r_small = jnp.zeros((HEAD_DIM, HEAD_DIM), jnp.float32)
    idx = jnp.arange(half)
    r_small = r_small.at[idx + half, idx].set(-1.0)   # rot col j (<half)  = -t[:, j+half]
    r_small = r_small.at[idx, idx + half].set(1.0)    # rot col j (>=half) = +t[:, j-half]
    r2 = jnp.kron(jnp.eye(2 * NUM_HEADS, dtype=jnp.float32), r_small)  # (2D, 2D)

    # per-(part,head) sum-of-squares indicator and its scaled transpose.
    ind2 = jnp.kron(jnp.eye(2 * NUM_HEADS, dtype=jnp.float32),
                    jnp.ones((HEAD_DIM, 1), jnp.float32))              # (2D, 2H)
    sqk_row = (sqk * (SQK_MULT * math.sqrt(ATTN_SCALE))).reshape(1, D_)
    sqk2 = jnp.concatenate([sqk_row, sqk_row], axis=1)                 # (1, 2D)
    exp2 = ind2.T * sqk2                                               # (2H, 2D)

    # RoPE tables expanded to the fused (B*S, 2D) layout (per head, per q|k).
    cos2 = jnp.tile(cos, (Bsz, 2 * NUM_HEADS))                         # (BS, 2D)
    sin2 = jnp.tile(sin, (Bsz, 2 * NUM_HEADS))

    # additive attention bias over flattened rows: attend iff same batch AND causal.
    r = jnp.arange(Bsz * S_)
    same_batch = (r[:, None] // S_) == (r[None, :] // S_)
    causal = (r[:, None] % S_) >= (r[None, :] % S_)
    bias = jnp.where(same_batch & causal, 0.0, NEG_INF).astype(jnp.float32)

    slab = jnp.zeros((SLAB_ROWS, SLAB_COLS), jnp.float32)
    slab = slab.at[ROW_WQKV:ROW_WQKV + D_, 0:3 * D_].set(wqkv)
    slab = slab.at[ROW_WUPGATE:ROW_WUPGATE + D_, 0:2 * HIDDEN].set(wupgate)
    slab = slab.at[ROW_R2:ROW_R2 + 2 * D_, 0:2 * D_].set(r2)
    slab = slab.at[ROW_WDOWN:ROW_WDOWN + HIDDEN, 0:D_].set(wdown)
    slab = slab.at[ROW_IND2:ROW_IND2 + 2 * D_, 0:2 * NUM_HEADS].set(ind2)
    slab = slab.at[ROW_COS2:ROW_COS2 + Bsz * S_, 0:2 * D_].set(cos2)
    slab = slab.at[ROW_SIN2:ROW_SIN2 + Bsz * S_, 0:2 * D_].set(sin2)
    slab = slab.at[ROW_EXP2:ROW_EXP2 + 2 * NUM_HEADS, 0:2 * D_].set(exp2)
    slab = slab.at[ROW_WO:ROW_WO + D_, 0:D_].set(wo)
    slab = slab.at[ROW_BIAS:ROW_BIAS + Bsz * S_, 0:Bsz * S_].set(bias)
    slab = slab.at[ROW_AA:ROW_AA + 1, 0:D_].set(aA.reshape(1, -1))
    slab = slab.at[ROW_AM:ROW_AM + 1, 0:D_].set(aM.reshape(1, -1))
    return slab


@jax.jit
def layer_forward(h, slab):
    """Per-call path: reshape + one pallas_call (2 operands total)."""
    Bsz, S_, D_ = h.shape
    out = pl.pallas_call(
        layer_kernel,
        out_shape=jax.ShapeDtypeStruct((Bsz * S_, D_), jnp.float32),
    )(h.reshape(Bsz * S_, D_), slab)
    return out.reshape(Bsz, S_, D_)
    # TODO(synk): for production batch sizes add a leading "parallel" grid axis
    # over rows so both v7x TensorCores share the work (pointless at (16, 32)).


# ---------------- pure-JAX reference (mirrors the torch module) ----------------
def ref_forward(h, cos, sin, params):
    wq, wk, wv, wo, sqk, wup, wgate, wdown, su, sv, aA, aM = params
    Bsz, S_, D_ = h.shape

    def cn(x):
        n = jnp.maximum(jnp.sqrt(jnp.sum(x * x, -1, keepdims=True)), 1e-6)
        return x / n

    def rope(x):  # x: (B, S, H, Hd), half-rotation convention
        c = cos[None, :, None, :]
        s = sin[None, :, None, :]
        half = HEAD_DIM // 2
        x1, x2 = x[..., :half], x[..., half:]
        return x * c + jnp.concatenate([-x2, x1], -1) * s

    q = (h @ wq).reshape(Bsz, S_, NUM_HEADS, HEAD_DIM)
    k = (h @ wk).reshape(Bsz, S_, NUM_HEADS, HEAD_DIM)
    v = (h @ wv).reshape(Bsz, S_, NUM_HEADS, HEAD_DIM)
    q, k = rope(q), rope(k)
    s_eff = sqk * SQK_MULT
    q = cn(q) * s_eff
    k = cn(k) * s_eff
    q = q.transpose(0, 2, 1, 3)
    k = k.transpose(0, 2, 1, 3)
    v = v.transpose(0, 2, 1, 3)
    logits = (q @ jnp.swapaxes(k, -1, -2)) * ATTN_SCALE
    causal = jnp.tril(jnp.ones((S_, S_), bool))
    logits = jnp.where(causal[None, None], logits, NEG_INF)
    probs = jax.nn.softmax(logits, -1)
    scores = (probs @ v).transpose(0, 2, 1, 3).reshape(Bsz, S_, D_)
    attn = scores @ wo
    h1 = cn(h + aA.reshape(-1) * (cn(attn) - h))
    u = (h1 @ wup) * su.reshape(-1)
    g = (h1 @ wgate) * (sv.reshape(-1) * MLP_SCALE)
    hid = u * (g * jax.nn.sigmoid(g))
    h_M = cn(hid @ wdown)
    return cn(h1 + aM.reshape(-1) * (h_M - h1))


if __name__ == "__main__":
    key = jax.random.PRNGKey(0)
    ks = jax.random.split(key, 8)
    h = jax.random.normal(ks[0], (B, S, D), jnp.float32)

    def linw(k, shape):  # deterministic nn.Linear-style init, (in, out) layout
        bound = 1.0 / math.sqrt(shape[0])
        return jax.random.uniform(k, shape, jnp.float32, -bound, bound)

    wq = linw(ks[1], (D, D))
    wk = linw(ks[2], (D, D))
    wv = linw(ks[3], (D, D))
    wo = linw(ks[4], (D, D))
    wup = linw(ks[5], (D, HIDDEN))
    wgate = linw(ks[6], (D, HIDDEN))
    wdown = linw(ks[7], (HIDDEN, D))
    sqk = jnp.ones((NUM_HEADS, HEAD_DIM), jnp.float32) * (1.0 / math.sqrt(D))
    su = jnp.ones((1, HIDDEN), jnp.float32)
    sv = jnp.ones((1, HIDDEN), jnp.float32)
    aA = jnp.ones((1, D), jnp.float32) * (1.0 / math.sqrt(D))
    aM = jnp.ones((1, D), jnp.float32) * (1.0 / math.sqrt(D))

    # RoPE frequencies (half-rotation convention matching apply_rotary_pos_emb)
    pos = jnp.arange(S, dtype=jnp.float32)
    inv_freq = 1.0 / (10000.0 ** (jnp.arange(0, HEAD_DIM, 2, dtype=jnp.float32) / HEAD_DIM))
    ang = pos[:, None] * inv_freq[None, :]                 # (S, Hd/2)
    cos = jnp.concatenate([jnp.cos(ang), jnp.cos(ang)], -1)
    sin = jnp.concatenate([jnp.sin(ang), jnp.sin(ang)], -1)

    params = (wq, wk, wv, wo, sqk, wup, wgate, wdown, su, sv, aA, aM)

    # one-time fusion of weights / tables into a single constant slab
    slab = jax.block_until_ready(build_constants(params, cos, sin))

    out = layer_forward(h, slab)
    out = jax.block_until_ready(out)

    ref = ref_forward(h, cos, sin, params)
    assert out.shape == (B, S, D)
    assert jnp.allclose(out, ref, atol=2e-4, rtol=2e-4), "kernel/reference mismatch"
    print("KERNEL_OK")
</pallas_src>

<mosaic_0001>
module attributes {stable_mosaic.version = 11 : i64} {
  func.func @layer_kernel(%arg0: memref<16x32xf32, #tpu.memory_space<vmem>>, %arg1: memref<360x128xf32, #tpu.memory_space<vmem>>, %arg2: memref<16x32xf32, #tpu.memory_space<vmem>>) attributes {dimension_semantics = [], scalar_prefetch = 0 : i64, scratch_operands = 0 : i64, tpu.core_type = #tpu.core_type<tc>} {
    %c0 = arith.constant 0 : index
    %c0_0 = arith.constant 0 : index
    %0 = vector.load %arg0[%c0, %c0_0] : memref<16x32xf32, #tpu.memory_space<vmem>>, vector<16x32xf32>
    %c0_1 = arith.constant 0 : index
    %c0_2 = arith.constant 0 : index
    %1 = vector.load %arg1[%c0_1, %c0_2] : memref<360x128xf32, #tpu.memory_space<vmem>>, vector<32x96xf32>
    %c32 = arith.constant 32 : index
    %c0_3 = arith.constant 0 : index
    %2 = vector.load %arg1[%c32, %c0_3] : memref<360x128xf32, #tpu.memory_space<vmem>>, vector<32x128xf32>
    %c64 = arith.constant 64 : index
    %c0_4 = arith.constant 0 : index
    %3 = vector.load %arg1[%c64, %c0_4] : memref<360x128xf32, #tpu.memory_space<vmem>>, vector<64x64xf32>
    %c128 = arith.constant 128 : index
    %c0_5 = arith.constant 0 : index
    %4 = vector.load %arg1[%c128, %c0_5] : memref<360x128xf32, #tpu.memory_space<vmem>>, vector<64x32xf32>
    %c192 = arith.constant 192 : index
    %c0_6 = arith.constant 0 : index
    %5 = vector.load %arg1[%c192, %c0_6] : memref<360x128xf32, #tpu.memory_space<vmem>>, vector<64x8xf32>
    %c256 = arith.constant 256 : index
    %c0_7 = arith.constant 0 : index
    %6 = vector.load %arg1[%c256, %c0_7] : memref<360x128xf32, #tpu.memory_space<vmem>>, vector<16x64xf32>
    %c272 = arith.constant 272 : index
    %c0_8 = arith.constant 0 : index
    %7 = vector.load %arg1[%c272, %c0_8] : memref<360x128xf32, #tpu.memory_space<vmem>>, vector<16x64xf32>
    %c288 = arith.constant 288 : index
    %c0_9 = arith.constant 0 : index
    %8 = vector.load %arg1[%c288, %c0_9] : memref<360x128xf32, #tpu.memory_space<vmem>>, vector<8x64xf32>
    %c296 = arith.constant 296 : index
    %c0_10 = arith.constant 0 : index
    %9 = vector.load %arg1[%c296, %c0_10] : memref<360x128xf32, #tpu.memory_space<vmem>>, vector<32x32xf32>
    %c328 = arith.constant 328 : index
    %c0_11 = arith.constant 0 : index
    %10 = vector.load %arg1[%c328, %c0_11] : memref<360x128xf32, #tpu.memory_space<vmem>>, vector<16x16xf32>
    %c344 = arith.constant 344 : index
    %c0_12 = arith.constant 0 : index
    %11 = vector.load %arg1[%c344, %c0_12] : memref<360x128xf32, #tpu.memory_space<vmem>>, vector<1x32xf32>
    %c352 = arith.constant 352 : index
    %c0_13 = arith.constant 0 : index
    %12 = vector.load %arg1[%c352, %c0_13] : memref<360x128xf32, #tpu.memory_space<vmem>>, vector<1x32xf32>
    %cst = arith.constant dense<0.000000e+00> : vector<16x96xf32>
    %13 = tpu.matmul %0, %1, %cst {dimension_numbers = #tpu.dot_dimension_numbers<[1], [0], [0], [1], [0, 0, 1, 1], [], []>} : vector<16x32xf32>, vector<32x96xf32>, vector<16x96xf32> -> vector<16x96xf32>
    %14 = vector.extract_strided_slice %13 {offsets = [0, 0], sizes = [16, 64], strides = [1, 1]} : vector<16x96xf32> to vector<16x64xf32>
    %15 = vector.extract_strided_slice %13 {offsets = [0, 64], sizes = [16, 32], strides = [1, 1]} : vector<16x96xf32> to vector<16x32xf32>
    %16 = arith.mulf %14, %6 : vector<16x64xf32>
    %cst_14 = arith.constant dense<0.000000e+00> : vector<16x64xf32>
    %17 = tpu.matmul %14, %3, %cst_14 {dimension_numbers = #tpu.dot_dimension_numbers<[1], [0], [0], [1], [0, 0, 1, 1], [], []>} : vector<16x64xf32>, vector<64x64xf32>, vector<16x64xf32> -> vector<16x64xf32>
    %18 = arith.mulf %17, %7 : vector<16x64xf32>
    %19 = arith.addf %16, %18 : vector<16x64xf32>
    %20 = arith.mulf %19, %19 : vector<16x64xf32>
    %cst_15 = arith.constant dense<0.000000e+00> : vector<16x8xf32>
    %21 = tpu.matmul %20, %5, %cst_15 {dimension_numbers = #tpu.dot_dimension_numbers<[1], [0], [0], [1], [0, 0, 1, 1], [], []>} : vector<16x64xf32>, vector<64x8xf32>, vector<16x8xf32> -> vector<16x8xf32>
    %cst_16 = arith.constant 9.99999996E-13 : f32
    %22 = vector.broadcast %cst_16 : f32 to vector<16x8xf32>
    %23 = arith.maximumf %21, %22 : vector<16x8xf32>
    %24 = math.rsqrt %23 : vector<16x8xf32>
    %cst_17 = arith.constant dense<0.000000e+00> : vector<16x64xf32>
    %25 = tpu.matmul %24, %8, %cst_17 {dimension_numbers = #tpu.dot_dimension_numbers<[1], [0], [0], [1], [0, 0, 1, 1], [], []>} : vector<16x8xf32>, vector<8x64xf32>, vector<16x64xf32> -> vector<16x64xf32>
    %26 = arith.mulf %19, %25 : vector<16x64xf32>
    %27 = vector.extract_strided_slice %26 {offsets = [0, 0], sizes = [16, 32], strides = [1, 1]} : vector<16x64xf32> to vector<16x32xf32>
    %28 = vector.shape_cast %27 : vector<16x32xf32> to vector<16x4x8xf32>
    %29 = tpu.transpose %28, [1, 0, 2] : vector<16x4x8xf32> -> vector<4x16x8xf32>
    %30 = vector.extract_strided_slice %26 {offsets = [0, 32], sizes = [16, 32], strides = [1, 1]} : vector<16x64xf32> to vector<16x32xf32>
    %31 = vector.shape_cast %30 : vector<16x32xf32> to vector<16x4x8xf32>
    %32 = tpu.transpose %31, [1, 0, 2] : vector<16x4x8xf32> -> vector<4x16x8xf32>
    %33 = vector.shape_cast %15 : vector<16x32xf32> to vector<16x4x8xf32>
    %34 = tpu.transpose %33, [1, 0, 2] : vector<16x4x8xf32> -> vector<4x16x8xf32>
    "tpu.trace_start"() <{level = 10 : i32, message = "hqd,hkd->hqk"}> : () -> ()
    %cst_18 = arith.constant dense<0.000000e+00> : vector<4x16x16xf32>
    %35 = tpu.matmul %29, %32, %cst_18 {dimension_numbers = #tpu.dot_dimension_numbers<[2], [2], [1], [1], [0, 0, 0, 1, 1, 1], [0], [0]>} : vector<4x16x8xf32>, vector<4x16x8xf32>, vector<4x16x16xf32> -> vector<4x16x16xf32>
    "tpu.trace_stop"() : () -> ()
    %36 = vector.shape_cast %10 : vector<16x16xf32> to vector<1x16x16xf32>
    %37 = vector.broadcast %36 : vector<1x16x16xf32> to vector<4x16x16xf32>
    %38 = arith.addf %35, %37 : vector<4x16x16xf32>
    %cst_19 = arith.constant dense<0xFF800000> : vector<4x16xf32>
    %39 = vector.multi_reduction <maximumf>, %38, %cst_19 [2] : vector<4x16x16xf32> to vector<4x16xf32>
    %40 = vector.shape_cast %39 : vector<4x16xf32> to vector<4x16x1xf32>
    %41 = vector.broadcast %40 : vector<4x16x1xf32> to vector<4x16x16xf32>
    %42 = arith.subf %38, %41 : vector<4x16x16xf32>
    %43 = math.exp %42 : vector<4x16x16xf32>
    %cst_20 = arith.constant dense<0.000000e+00> : vector<4x16xf32>
    %44 = vector.multi_reduction <add>, %43, %cst_20 [2] : vector<4x16x16xf32> to vector<4x16xf32>
    %45 = vector.shape_cast %44 : vector<4x16xf32> to vector<4x16x1xf32>
    "tpu.trace_start"() <{level = 10 : i32, message = "hqk,hkd->hqd"}> : () -> ()
    %cst_21 = arith.constant dense<0.000000e+00> : vector<4x16x8xf32>
    %46 = tpu.matmul %43, %34, %cst_21 {dimension_numbers = #tpu.dot_dimension_numbers<[2], [1], [1], [2], [0, 0, 0, 1, 1, 2], [0], [0]>} : vector<4x16x16xf32>, vector<4x16x8xf32>, vector<4x16x8xf32> -> vector<4x16x8xf32>
    "tpu.trace_stop"() : () -> ()
    %47 = tpu.reciprocal %45 : vector<4x16x1xf32> -> vector<4x16x1xf32>
    %48 = vector.broadcast %47 : vector<4x16x1xf32> to vector<4x16x8xf32>
    %49 = arith.mulf %46, %48 : vector<4x16x8xf32>
    %50 = tpu.transpose %49, [1, 0, 2] : vector<4x16x8xf32> -> vector<16x4x8xf32>
    %51 = vector.shape_cast %50 : vector<16x4x8xf32> to vector<16x32xf32>
    %cst_22 = arith.constant dense<0.000000e+00> : vector<16x32xf32>
    %52 = tpu.matmul %51, %9, %cst_22 {dimension_numbers = #tpu.dot_dimension_numbers<[1], [0], [0], [1], [0, 0, 1, 1], [], []>} : vector<16x32xf32>, vector<32x32xf32>, vector<16x32xf32> -> vector<16x32xf32>
    %53 = arith.mulf %52, %52 : vector<16x32xf32>
    %cst_23 = arith.constant dense<0.000000e+00> : vector<16xf32>
    %54 = vector.multi_reduction <add>, %53, %cst_23 [1] : vector<16x32xf32> to vector<16xf32>
    %55 = vector.shape_cast %54 : vector<16xf32> to vector<16x1xf32>
    %cst_24 = arith.constant 9.99999996E-13 : f32
    %56 = vector.broadcast %cst_24 : f32 to vector<16x1xf32>
    %57 = arith.maximumf %55, %56 : vector<16x1xf32>
    %58 = math.rsqrt %57 : vector<16x1xf32>
    %59 = vector.broadcast %58 : vector<16x1xf32> to vector<16x32xf32>
    %60 = arith.mulf %52, %59 : vector<16x32xf32>
    %61 = arith.subf %60, %0 : vector<16x32xf32>
    %62 = vector.broadcast %11 : vector<1x32xf32> to vector<16x32xf32>
    %63 = arith.mulf %62, %61 : vector<16x32xf32>
    %64 = arith.addf %0, %63 : vector<16x32xf32>
    %65 = arith.mulf %64, %64 : vector<16x32xf32>
    %cst_25 = arith.constant dense<0.000000e+00> : vector<16xf32>
    %66 = vector.multi_reduction <add>, %65, %cst_25 [1] : vector<16x32xf32> to vector<16xf32>
    %67 = vector.shape_cast %66 : vector<16xf32> to vector<16x1xf32>
    %cst_26 = arith.constant 9.99999996E-13 : f32
    %68 = vector.broadcast %cst_26 : f32 to vector<16x1xf32>
    %69 = arith.maximumf %67, %68 : vector<16x1xf32>
    %70 = math.rsqrt %69 : vector<16x1xf32>
    %71 = vector.broadcast %70 : vector<16x1xf32> to vector<16x32xf32>
    %72 = arith.mulf %64, %71 : vector<16x32xf32>
    %cst_27 = arith.constant dense<0.000000e+00> : vector<16x128xf32>
    %73 = tpu.matmul %72, %2, %cst_27 {dimension_numbers = #tpu.dot_dimension_numbers<[1], [0], [0], [1], [0, 0, 1, 1], [], []>} : vector<16x32xf32>, vector<32x128xf32>, vector<16x128xf32> -> vector<16x128xf32>
    %74 = vector.extract_strided_slice %73 {offsets = [0, 0], sizes = [16, 64], strides = [1, 1]} : vector<16x128xf32> to vector<16x64xf32>
    %75 = vector.extract_strided_slice %73 {offsets = [0, 64], sizes = [16, 64], strides = [1, 1]} : vector<16x128xf32> to vector<16x64xf32>
    %76 = arith.negf %75 : vector<16x64xf32>
    %77 = math.exp %76 : vector<16x64xf32>
    %cst_28 = arith.constant 1.000000e+00 : f32
    %78 = vector.broadcast %cst_28 : f32 to vector<16x64xf32>
    %79 = arith.addf %78, %77 : vector<16x64xf32>
    %80 = arith.divf %78, %79 : vector<16x64xf32>
    %81 = arith.mulf %75, %80 : vector<16x64xf32>
    %82 = arith.mulf %74, %81 : vector<16x64xf32>
    %cst_29 = arith.constant dense<0.000000e+00> : vector<16x32xf32>
    %83 = tpu.matmul %82, %4, %cst_29 {dimension_numbers = #tpu.dot_dimension_numbers<[1], [0], [0], [1], [0, 0, 1, 1], [], []>} : vector<16x64xf32>, vector<64x32xf32>, vector<16x32xf32> -> vector<16x32xf32>
    %84 = arith.mulf %83, %83 : vector<16x32xf32>
    %cst_30 = arith.constant dense<0.000000e+00> : vector<16xf32>
    %85 = vector.multi_reduction <add>, %84, %cst_30 [1] : vector<16x32xf32> to vector<16xf32>
    %86 = vector.shape_cast %85 : vector<16xf32> to vector<16x1xf32>
    %cst_31 = arith.constant 9.99999996E-13 : f32
    %87 = vector.broadcast %cst_31 : f32 to vector<16x1xf32>
    %88 = arith.maximumf %86, %87 : vector<16x1xf32>
    %89 = math.rsqrt %88 : vector<16x1xf32>
    %90 = vector.broadcast %89 : vector<16x1xf32> to vector<16x32xf32>
    %91 = arith.mulf %83, %90 : vector<16x32xf32>
    %92 = arith.subf %91, %72 : vector<16x32xf32>
    %93 = vector.broadcast %12 : vector<1x32xf32> to vector<16x32xf32>
    %94 = arith.mulf %93, %92 : vector<16x32xf32>
    %95 = arith.addf %72, %94 : vector<16x32xf32>
    %96 = arith.mulf %95, %95 : vector<16x32xf32>
    %cst_32 = arith.constant dense<0.000000e+00> : vector<16xf32>
    %97 = vector.multi_reduction <add>, %96, %cst_32 [1] : vector<16x32xf32> to vector<16xf32>
    %98 = vector.shape_cast %97 : vector<16xf32> to vector<16x1xf32>
    %cst_33 = arith.constant 9.99999996E-13 : f32
    %99 = vector.broadcast %cst_33 : f32 to vector<16x1xf32>
    %100 = arith.maximumf %98, %99 : vector<16x1xf32>
    %101 = math.rsqrt %100 : vector<16x1xf32>
    %102 = vector.broadcast %101 : vector<16x1xf32> to vector<16x32xf32>
    %103 = arith.mulf %95, %102 : vector<16x32xf32>
    %c0_34 = arith.constant 0 : index
    %c0_35 = arith.constant 0 : index
    %104 = vector.load %arg2[%c0_34, %c0_35] : memref<16x32xf32, #tpu.memory_space<vmem>>, vector<16x32xf32>
    tpu.vector_store %arg2[%c0_34, %c0_35], %103 {strides = array<i32>} : memref<16x32xf32, #tpu.memory_space<vmem>>, vector<16x32xf32>,
    return
  }
}

</mosaic_0001>

<llo_original>
// kernel: layer_forward.1
$region0: #{layer_forward.1}
  #allocation0 [shape = 'u32[]', space=smem, size = 0x4, offset = 0x4, fixed_abs, tag = 'smem constant byte address 0x4 - core index']
  #allocation1 [shape = 'u32[144,128]{1,0:T(1,128)}', space=vmem, size = 0x12000, scoped, tag = 'internal scratch']
  %s0 = inlined_call_operand.hbm [shape: f32[16,32], index: 0, kind: input, shape index: {}]
  %s1 = inlined_call_operand.hbm [shape: f32[360,128], index: 1, kind: input, shape index: {}]
  %s2 = inlined_call_operand.hbm [shape: f32[16,32], index: 2, kind: output, shape index: {}]
  %s3 = sld [smem:[#allocation0]]
  $region26: #{layer_forward.1} parent=0
    _
  %s5 = ssub.s32 1, %s3
  %s6 = scalar_select 0, %s5, %s3
  $region1: #{layer_forward.1} parent=0
    #allocation2 [shape = 'u8[8192]{0}', space=vmem, size = 0x2000, scoped, tag = 'input window, operand 0, single buffered']
    #allocation3 [shape = 's32[1]{0}', space=sflag, size = 0x4, scoped, tag = 'scoped memory for layer_forward.1']
    #allocation4 [shape = 's32[1]{0}', space=sflag, size = 0x4, scoped, tag = 'scoped memory for layer_forward.1']
    #allocation5 [shape = 'u8[184320]{0}', space=vmem, size = 0x2d000, scoped, tag = 'input window, operand 1, single buffered']
    #allocation6 [shape = 's32[1]{0}', space=sflag, size = 0x4, scoped, tag = 'scoped memory for layer_forward.1']
    #allocation7 [shape = 'u8[8192]{0}', space=vmem, size = 0x2000, scoped, tag = 'output window, operand 0, single buffered']
    %7 = vsyncpa [#allocation3], 0
    %8 = vsyncpa [#allocation6], 0
    %9 = vsyncpa [#allocation4], 0
    // Predicated region
    $region2: #{layer_forward.1} parent=1 // pred_check
      _
    $region3: #{layer_forward.1} parent=1 // pred_check_branch
      %11 = sbr.rel (0) target = $region5
    $region4: #{layer_forward.1} parent=1 // pred_region
      %s13 = ssub.s32 256, 256
      %14 = vsyncadd [#allocation3], %s13
      %s15 = sshll.u32 [#allocation2], 4
      %s16 = int_to_ptr.vmem [resolvable:$true] %s15
      %21 = dma.hbm_to_vmem [thread:$0]  %s0, 256, %s16, [#allocation3], 128, 128, 8
    $region5: #{layer_forward.1} parent=1 // pred_fallthru
      _
    // Predicated region
    $region6: #{layer_forward.1} parent=1 // pred_check
      _
    $region7: #{layer_forward.1} parent=1 // pred_check_branch
      %23 = sbr.rel (0) target = $region9
    $region8: #{layer_forward.1} parent=1 // pred_region
      %s25 = ssub.s32 5760, 5760
      %26 = vsyncadd [#allocation6], %s25
      %s27 = sshll.u32 [#allocation5], 4
      %s28 = int_to_ptr.vmem [resolvable:$true] %s27
      %33 = dma.hbm_to_vmem [thread:$0]  %s1, 5760, %s28, [#allocation6], 128, 128, 8
    $region9: #{layer_forward.1} parent=1 // pred_fallthru
      _
    // Predicated region
    $region10: #{layer_forward.1} parent=1 // pred_check
      _
    $region11: #{layer_forward.1} parent=1 // pred_check_branch
      %35 = sbr.rel (0) target = $region13
    $region12: #{layer_forward.1} parent=1 // pred_region
      %36 = dma.done [#allocation3], 256
    $region13: #{layer_forward.1} parent=1 // pred_fallthru
      _
    // Predicated region
    $region14: #{layer_forward.1} parent=1 // pred_check
      _
    $region15: #{layer_forward.1} parent=1 // pred_check_branch
      %38 = sbr.rel (0) target = $region17
    $region16: #{layer_forward.1} parent=1 // pred_region
      %39 = dma.done [#allocation6], 5760
    $region17: #{layer_forward.1} parent=1 // pred_fallthru
      _
    %v40 = vld [vmem:[#allocation2] sm:$0xff]
    %v41 = vld [vmem:[#allocation2 + $0x8] sm:$0xff]
    %v42 = vld [vmem:[#allocation5] sm:$0xff]
    %v43 = vld [vmem:[#allocation5 + $0x8] sm:$0xff]
    %v44 = vld [vmem:[#allocation5 + $0x10] sm:$0xff]
    %v45 = vld [vmem:[#allocation5 + $0x18] sm:$0xff]
    %v46 = vld [vmem:[#allocation5 + $0x20] sm:$0xff]
    %v47 = vld [vmem:[#allocation5 + $0x28] sm:$0xff]
    %v48 = vld [vmem:[#allocation5 + $0x30] sm:$0xff]
    %v49 = vld [vmem:[#allocation5 + $0x38] sm:$0xff]
    %v50 = vld [vmem:[#allocation5 + $0x40] sm:$0xff]
    %v51 = vld [vmem:[#allocation5 + $0x48] sm:$0xff]
    %v52 = vld [vmem:[#allocation5 + $0x50] sm:$0xff]
    %v53 = vld [vmem:[#allocation5 + $0x58] sm:$0xff]
    %v54 = vld [vmem:[#allocation5 + $0x60] sm:$0xff]
    %v55 = vld [vmem:[#allocation5 + $0x68] sm:$0xff]
    %v56 = vld [vmem:[#allocation5 + $0x70] sm:$0xff]
    %v57 = vld [vmem:[#allocation5 + $0x78] sm:$0xff]
    %v58 = vld [vmem:[#allocation5 + $0x80] sm:$0xff]
    %v59 = vld [vmem:[#allocation5 + $0x88] sm:$0xff]
    %v60 = vld [vmem:[#allocation5 + $0x90] sm:$0xff]
    %v61 = vld [vmem:[#allocation5 + $0x98] sm:$0xff]
    %v62 = vld [vmem:[#allocation5 + $0xa0] sm:$0xff]
    %v63 = vld [vmem:[#allocation5 + $0xa8] sm:$0xff]
    %v64 = vld [vmem:[#allocation5 + $0xb0] sm:$0xff]
    %v65 = vld [vmem:[#allocation5 + $0xb8] sm:$0xff]
    %v66 = vld [vmem:[#allocation5 + $0xc0] sm:$0xff]
    %v67 = vld [vmem:[#allocation5 + $0xc8] sm:$0xff]
    %v68 = vld [vmem:[#allocation5 + $0xd0] sm:$0xff]
    %v69 = vld [vmem:[#allocation5 + $0xd8] sm:$0xff]
    %v70 = vld [vmem:[#allocation5 + $0xe0] sm:$0xff]
    %v71 = vld [vmem:[#allocation5 + $0xe8] sm:$0xff]
    %v72 = vld [vmem:[#allocation5 + $0xf0] sm:$0xff]
    %v73 = vld [vmem:[#allocation5 + $0xf8] sm:$0xff]
    %v74 = vld [vmem:[#allocation5 + $0x100] sm:$0xff]
    %v75 = vld [vmem:[#allocation5 + $0x108] sm:$0xff]
    %v76 = vld [vmem:[#allocation5 + $0x110] sm:$0xff]
    %v77 = vld [vmem:[#allocation5 + $0x118] sm:$0xff]
    %v78 = vld [vmem:[#allocation5 + $0x120] sm:$0xff]
    %v79 = vld [vmem:[#allocation5 + $0x128] sm:$0xff]
    %v80 = vld [vmem:[#allocation5 + $0x130] sm:$0xff]
    %v81 = vld [vmem:[#allocation5 + $0x138] sm:$0xff]
    %v82 = vld [vmem:[#allocation5 + $0x140] sm:$0xff]
    %v83 = vld [vmem:[#allocation5 + $0x148] sm:$0xff]
    %v84 = vld [vmem:[#allocation5 + $0x150] sm:$0xff]
    %v85 = vld [vmem:[#allocation5 + $0x158] sm:$0x1]
    %v86 = vld [vmem:[#allocation5 + $0x160] sm:$0x1]
    %vm87 = vcmask 261120
    %v89 = vsel %vm87, %v40, 0
    %v92 = vsel %vm87, %v41, 0
    %94 = vmatprep.subr.mxu0 0.0
    %95 = vmatpush1.msra.mxu0 %v42
    %96 = vmatprep.subr.mxu0 0.0
    %97 = vmatpush1.msra.mxu0 %v43
    %98 = vmatprep.subr.mxu0 0.0
    %99 = vmatpush1.msra.mxu0 %v44
    %100 = vmatprep.subr.mxu0 0.0
    %101 = vmatpush1.msra.mxu0 %v45
    %102 = vmatprep.subr.mxu0 0.0
    %103 = vmatpush1.msra.mxu0 0.0
    %104 = vmatprep.subr.mxu0 0.0
    %105 = vmatpush1.msra.mxu0 0.0
    %106 = vmatprep.subr.mxu0 0.0
    %107 = vmatpush1.msra.mxu0 0.0
    %108 = vmatprep.subr.mxu0 0.0
    %109 = vmatpush1.msra.mxu0 0.0
    %110 = vmatprep.subr.mxu0 0.0
    %111 = vmatpush1.msra.mxu0 0.0
    %112 = vmatprep.subr.mxu0 0.0
    %113 = vmatpush1.msra.mxu0 0.0
    %114 = vmatprep.subr.mxu0 0.0
    %115 = vmatpush1.msra.mxu0 0.0
    %116 = vmatprep.subr.mxu0 0.0
    %117 = vmatpush1.msra.mxu0 0.0
    %118 = vmatprep.subr.mxu0 0.0
    %119 = vmatpush1.msra.mxu0 0.0
    %120 = vmatprep.subr.mxu0 0.0
    %121 = vmatpush1.msra.mxu0 0.0
    %122 = vmatprep.subr.mxu0 0.0
    %123 = vmatpush1.msra.mxu0 0.0
    %124 = vmatprep.subr.mxu0 0.0
    %125 = vmatpush1.msra.mxu0 0.0
    %126 = vmatprep.subr.mxu0 0.0
    %127 = vmatpush1.msra.mxu0 0.0
    %128 = vmatprep.subr.mxu0 0.0
    %129 = vmatpush1.msra.mxu0 0.0
    %130 = vmatprep.subr.mxu0 0.0
    %131 = vmatpush1.msra.mxu0 0.0
    %132 = vmatprep.subr.mxu0 0.0
    %133 = vmatpush1.msra.mxu0 0.0
    %134 = vmatprep.subr.mxu0 0.0
    %135 = vmatpush1.msra.mxu0 0.0
    %136 = vmatprep.subr.mxu0 0.0
    %137 = vmatpush1.msra.mxu0 0.0
    %138 = vmatprep.subr.mxu0 0.0
    %139 = vmatpush1.msra.mxu0 0.0
    %140 = vmatprep.subr.mxu0 0.0
    %141 = vmatpush1.msra.mxu0 0.0
    %142 = vmatprep.subr.mxu0 0.0
    %143 = vmatpush1.msra.mxu0 0.0
    %144 = vmatprep.subr.mxu0 0.0
    %145 = vmatpush1.msra.mxu0 0.0
    %146 = vmatprep.subr.mxu0 0.0
    %147 = vmatpush1.msra.mxu0 0.0
    %148 = vmatprep.subr.mxu0 0.0
    %149 = vmatpush1.msra.mxu0 0.0
    %150 = vmatprep.subr.mxu0 0.0
    %151 = vmatpush1.msra.mxu0 0.0
    %152 = vmatprep.subr.mxu0 0.0
    %153 = vmatpush1.msra.mxu0 0.0
    %154 = vmatprep.subr.mxu0 0.0
    %155 = vmatpush1.msra.mxu0 0.0
    %156 = vmatprep.subr.mxu0 0.0
    %157 = vmatpush1.msra.mxu0 0.0
    %158 = vmatprep.mubr.f32.mxu0 0.0
    %159 = vmatmul.mubr.f32.gmra.mrb[0].mxu0 %v89
    %v160 = vpop.f32.mrb[0].mxu0
    %v161 = vadd.f32 0.0, %v160
    %v162 = vpop.f32.mrb[0].mxu0
    %163 = vmatprep.mubr.f32.mxu0 0.0
    %164 = vmatmul.mubr.f32.gmra.mrb[0].mxu0 %v92
    %v165 = vpop.f32.mrb[0].mxu0
    %v166 = vadd.f32 0.0, %v165
    %v167 = vpop.f32.mrb[0].mxu0
    %168 = vdwg.mxu0
    %v169 = vmul.f32 %v161, %v74
    %v170 = vmul.f32 %v166, %v75
    %vm171 = vcmask 523264
    %v173 = vsel %vm171, %v161, 0
    %v176 = vsel %vm171, %v166, 0
    %178 = vmatprep.subr.mxu0 0.0
    %179 = vmatpush1.msra.mxu0 %v50
    %180 = vmatprep.subr.mxu0 0.0
    %181 = vmatpush1.msra.mxu0 %v51
    %182 = vmatprep.subr.mxu0 0.0
    %183 = vmatpush1.msra.mxu0 %v52
    %184 = vmatprep.subr.mxu0 0.0
    %185 = vmatpush1.msra.mxu0 %v53
    %186 = vmatprep.subr.mxu0 0.0
    %187 = vmatpush1.msra.mxu0 %v54
    %188 = vmatprep.subr.mxu0 0.0
    %189 = vmatpush1.msra.mxu0 %v55
    %190 = vmatprep.subr.mxu0 0.0
    %191 = vmatpush1.msra.mxu0 %v56
    %192 = vmatprep.subr.mxu0 0.0
    %193 = vmatpush1.msra.mxu0 %v57
    %194 = vmatprep.subr.mxu0 0.0
    %195 = vmatpush1.msra.mxu0 0.0
    %196 = vmatprep.subr.mxu0 0.0
    %197 = vmatpush1.msra.mxu0 0.0
    %198 = vmatprep.subr.mxu0 0.0
    %199 = vmatpush1.msra.mxu0 0.0
    %200 = vmatprep.subr.mxu0 0.0
    %201 = vmatpush1.msra.mxu0 0.0
    %202 = vmatprep.subr.mxu0 0.0
    %203 = vmatpush1.msra.mxu0 0.0
    %204 = vmatprep.subr.mxu0 0.0
    %205 = vmatpush1.msra.mxu0 0.0
    %206 = vmatprep.subr.mxu0 0.0
    %207 = vmatpush1.msra.mxu0 0.0
    %208 = vmatprep.subr.mxu0 0.0
    %209 = vmatpush1.msra.mxu0 0.0
    %210 = vmatprep.subr.mxu0 0.0
    %211 = vmatpush1.msra.mxu0 0.0
    %212 = vmatprep.subr.mxu0 0.0
    %213 = vmatpush1.msra.mxu0 0.0
    %214 = vmatprep.subr.mxu0 0.0
    %215 = vmatpush1.msra.mxu0 0.0
    %216 = vmatprep.subr.mxu0 0.0
    %217 = vmatpush1.msra.mxu0 0.0
    %218 = vmatprep.subr.mxu0 0.0
    %219 = vmatpush1.msra.mxu0 0.0
    %220 = vmatprep.subr.mxu0 0.0
    %221 = vmatpush1.msra.mxu0 0.0
    %222 = vmatprep.subr.mxu0 0.0
    %223 = vmatpush1.msra.mxu0 0.0
    %224 = vmatprep.subr.mxu0 0.0
    %225 = vmatpush1.msra.mxu0 0.0
    %226 = vmatprep.subr.mxu0 0.0
    %227 = vmatpush1.msra.mxu0 0.0
    %228 = vmatprep.subr.mxu0 0.0
    %229 = vmatpush1.msra.mxu0 0.0
    %230 = vmatprep.subr.mxu0 0.0
    %231 = vmatpush1.msra.mxu0 0.0
    %232 = vmatprep.subr.mxu0 0.0
    %233 = vmatpush1.msra.mxu0 0.0
    %234 = vmatprep.subr.mxu0 0.0
    %235 = vmatpush1.msra.mxu0 0.0
    %236 = vmatprep.subr.mxu0 0.0
    %237 = vmatpush1.msra.mxu0 0.0
    %238 = vmatprep.subr.mxu0 0.0
    %239 = vmatpush1.msra.mxu0 0.0
    %240 = vmatprep.subr.mxu0 0.0
    %241 = vmatpush1.msra.mxu0 0.0
    %242 = vmatprep.mubr.f32.mxu0 0.0
    %243 = vmatmul.mubr.f32.gmra.mrb[0].mxu0 %v173
    %v244 = vpop.f32.mrb[0].mxu0
    %v245 = vadd.f32 0.0, %v244
    %v246 = vpop.f32.mrb[0].mxu0
    %247 = vmatprep.mubr.f32.mxu0 0.0
    %248 = vmatmul.mubr.f32.gmra.mrb[0].mxu0 %v176
    %v249 = vpop.f32.mrb[0].mxu0
    %v250 = vadd.f32 0.0, %v249
    %v251 = vpop.f32.mrb[0].mxu0
    %252 = vdwg.mxu0
    %v253 = vmul.f32 %v245, %v76
    %v254 = vmul.f32 %v250, %v77
    %v255 = vadd.f32 %v169, %v253
    %v256 = vadd.f32 %v170, %v254
    %v257 = vmul.f32 %v255, %v255
    %v258 = vmul.f32 %v256, %v256
    %v260 = vsel %vm171, %v257, 0
    %v263 = vsel %vm171, %v258, 0
    %265 = vmatprep.subr.mxu0 0.0
    %266 = vmatpush1.msra.mxu0 %v66
    %267 = vmatprep.subr.mxu0 0.0
    %268 = vmatpush1.msra.mxu0 %v67
    %269 = vmatprep.subr.mxu0 0.0
    %270 = vmatpush1.msra.mxu0 %v68
    %271 = vmatprep.subr.mxu0 0.0
    %272 = vmatpush1.msra.mxu0 %v69
    %273 = vmatprep.subr.mxu0 0.0
    %274 = vmatpush1.msra.mxu0 %v70
    %275 = vmatprep.subr.mxu0 0.0
    %276 = vmatpush1.msra.mxu0 %v71
    %277 = vmatprep.subr.mxu0 0.0
    %278 = vmatpush1.msra.mxu0 %v72
    %279 = vmatprep.subr.mxu0 0.0
    %280 = vmatpush1.msra.mxu0 %v73
    %281 = vmatprep.subr.mxu0 0.0
    %282 = vmatpush1.msra.mxu0 0.0
    %283 = vmatprep.subr.mxu0 0.0
    %284 = vmatpush1.msra.mxu0 0.0
    %285 = vmatprep.subr.mxu0 0.0
    %286 = vmatpush1.msra.mxu0 0.0
    %287 = vmatprep.subr.mxu0 0.0
    %288 = vmatpush1.msra.mxu0 0.0
    %289 = vmatprep.subr.mxu0 0.0
    %290 = vmatpush1.msra.mxu0 0.0
    %291 = vmatprep.subr.mxu0 0.0
    %292 = vmatpush1.msra.mxu0 0.0
    %293 = vmatprep.subr.mxu0 0.0
    %294 = vmatpush1.msra.mxu0 0.0
    %295 = vmatprep.subr.mxu0 0.0
    %296 = vmatpush1.msra.mxu0 0.0
    %297 = vmatprep.subr.mxu0 0.0
    %298 = vmatpush1.msra.mxu0 0.0
    %299 = vmatprep.subr.mxu0 0.0
    %300 = vmatpush1.msra.mxu0 0.0
    %301 = vmatprep.subr.mxu0 0.0
    %302 = vmatpush1.msra.mxu0 0.0
    %303 = vmatprep.subr.mxu0 0.0
    %304 = vmatpush1.msra.mxu0 0.0
    %305 = vmatprep.subr.mxu0 0.0
    %306 = vmatpush1.msra.mxu0 0.0
    %307 = vmatprep.subr.mxu0 0.0
    %308 = vmatpush1.msra.mxu0 0.0
    %309 = vmatprep.subr.mxu0 0.0
    %310 = vmatpush1.msra.mxu0 0.0
    %311 = vmatprep.subr.mxu0 0.0
    %312 = vmatpush1.msra.mxu0 0.0
    %313 = vmatprep.subr.mxu0 0.0
    %314 = vmatpush1.msra.mxu0 0.0
    %315 = vmatprep.subr.mxu0 0.0
    %316 = vmatpush1.msra.mxu0 0.0
    %317 = vmatprep.subr.mxu0 0.0
    %318 = vmatpush1.msra.mxu0 0.0
    %319 = vmatprep.subr.mxu0 0.0
    %320 = vmatpush1.msra.mxu0 0.0
    %321 = vmatprep.subr.mxu0 0.0
    %322 = vmatpush1.msra.mxu0 0.0
    %323 = vmatprep.subr.mxu0 0.0
    %324 = vmatpush1.msra.mxu0 0.0
    %325 = vmatprep.subr.mxu0 0.0
    %326 = vmatpush1.msra.mxu0 0.0
    %327 = vmatprep.subr.mxu0 0.0
    %328 = vmatpush1.msra.mxu0 0.0
    %329 = vmatprep.mubr.f32.mxu0 0.0
    %330 = vmatmul.mubr.f32.gmra.mrb[0].mxu0 %v260
    %v331 = vpop.f32.mrb[0].mxu0
    %v332 = vadd.f32 0.0, %v331
    %v333 = vpop.f32.mrb[0].mxu0
    %334 = vmatprep.mubr.f32.mxu0 0.0
    %335 = vmatmul.mubr.f32.gmra.mrb[0].mxu0 %v263
    %v336 = vpop.f32.mrb[0].mxu0
    %v337 = vadd.f32 0.0, %v336
    %v338 = vpop.f32.mrb[0].mxu0
    %339 = vdwg.mxu0
    %v340 = vmax.f32 %v332, 1e-12
    %v341 = vmax.f32 %v337, 1e-12
    %v342 = vrsqrt.pop %v340
    %v343 = vrsqrt.pop %v341
    %vm344 = vcmask 64512
    %v346 = vsel %vm344, %v342, 0
    %v349 = vsel %vm344, %v343, 0
    %351 = vmatprep.subr.mxu0 0.0
    %352 = vmatpush1.msra.mxu0 %v78
    %353 = vmatprep.subr.mxu0 0.0
    %354 = vmatpush1.msra.mxu0 0.0
    %355 = vmatprep.subr.mxu0 0.0
    %356 = vmatpush1.msra.mxu0 0.0
    %357 = vmatprep.subr.mxu0 0.0
    %358 = vmatpush1.msra.mxu0 0.0
    %359 = vmatprep.subr.mxu0 0.0
    %360 = vmatpush1.msra.mxu0 0.0
    %361 = vmatprep.subr.mxu0 0.0
    %362 = vmatpush1.msra.mxu0 0.0
    %363 = vmatprep.subr.mxu0 0.0
    %364 = vmatpush1.msra.mxu0 0.0
    %365 = vmatprep.subr.mxu0 0.0
    %366 = vmatpush1.msra.mxu0 0.0
    %367 = vmatprep.subr.mxu0 0.0
    %368 = vmatpush1.msra.mxu0 0.0
    %369 = vmatprep.subr.mxu0 0.0
    %370 = vmatpush1.msra.mxu0 0.0
    %371 = vmatprep.subr.mxu0 0.0
    %372 = vmatpush1.msra.mxu0 0.0
    %373 = vmatprep.subr.mxu0 0.0
    %374 = vmatpush1.msra.mxu0 0.0
    %375 = vmatprep.subr.mxu0 0.0
    %376 = vmatpush1.msra.mxu0 0.0
    %377 = vmatprep.subr.mxu0 0.0
    %378 = vmatpush1.msra.mxu0 0.0
    %379 = vmatprep.subr.mxu0 0.0
    %380 = vmatpush1.msra.mxu0 0.0
    %381 = vmatprep.subr.mxu0 0.0
    %382 = vmatpush1.msra.mxu0 0.0
    %383 = vmatprep.subr.mxu0 0.0
    %384 = vmatpush1.msra.mxu0 0.0
    %385 = vmatprep.subr.mxu0 0.0
    %386 = vmatpush1.msra.mxu0 0.0
    %387 = vmatprep.subr.mxu0 0.0
    %388 = vmatpush1.msra.mxu0 0.0
    %389 = vmatprep.subr.mxu0 0.0
    %390 = vmatpush1.msra.mxu0 0.0
    %391 = vmatprep.subr.mxu0 0.0
    %392 = vmatpush1.msra.mxu0 0.0
    %393 = vmatprep.subr.mxu0 0.0
    %394 = vmatpush1.msra.mxu0 0.0
    %395 = vmatprep.subr.mxu0 0.0
    %396 = vmatpush1.msra.mxu0 0.0
    %397 = vmatprep.subr.mxu0 0.0
    %398 = vmatpush1.msra.mxu0 0.0
    %399 = vmatprep.subr.mxu0 0.0
    %400 = vmatpush1.msra.mxu0 0.0
    %401 = vmatprep.subr.mxu0 0.0
    %402 = vmatpush1.msra.mxu0 0.0
    %403 = vmatprep.subr.mxu0 0.0
    %404 = vmatpush1.msra.mxu0 0.0
    %405 = vmatprep.subr.mxu0 0.0
    %406 = vmatpush1.msra.mxu0 0.0
    %407 = vmatprep.subr.mxu0 0.0
    %408 = vmatpush1.msra.mxu0 0.0
    %409 = vmatprep.subr.mxu0 0.0
    %410 = vmatpush1.msra.mxu0 0.0
    %411 = vmatprep.subr.mxu0 0.0
    %412 = vmatpush1.msra.mxu0 0.0
    %413 = vmatprep.subr.mxu0 0.0
    %414 = vmatpush1.msra.mxu0 0.0
    %415 = vmatprep.mubr.f32.mxu0 0.0
    %416 = vmatmul.mubr.f32.gmra.mrb[0].mxu0 %v346
    %v417 = vpop.f32.mrb[0].mxu0
    %v418 = vadd.f32 0.0, %v417
    %v419 = vpop.f32.mrb[0].mxu0
    %420 = vmatprep.mubr.f32.mxu0 0.0
    %421 = vmatmul.mubr.f32.gmra.mrb[0].mxu0 %v349
    %v422 = vpop.f32.mrb[0].mxu0
    %v423 = vadd.f32 0.0, %v422
    %v424 = vpop.f32.mrb[0].mxu0
    %425 = vdwg.mxu0
    %v426 = vmul.f32 %v255, %v418
    %v427 = vmul.f32 %v256, %v423
    %430 = vrot.lane.b32.xlu0 %v426, 120
    %v431 = vpop.permute.xlu0 %430
    %432 = vrot.lane.b32.xlu0 %v427, 120
    %v433 = vpop.permute.xlu0 %432
    %436 = vrot.lane.b32.xlu0 %v426, 112
    %v437 = vpop.permute.xlu0 %436
    %438 = vrot.lane.b32.xlu0 %v427, 112
    %v439 = vpop.permute.xlu0 %438
    %442 = vrot.lane.b32.xlu0 %v426, 104
    %v443 = vpop.permute.xlu0 %442
    %444 = vrot.lane.b32.xlu0 %v427, 104
    %v445 = vpop.permute.xlu0 %444
    %v448 = vcombine.low %v426, %v437
    %v449 = vcombine.high %v426, %v437
    %v451 = vunpack.c.l.s4 1983009808
    %v452 = vunpack.c.0.s8 %v451
    %v453 = vlaneseq
    %v454 = vshrl.u32 %v453, 7
    %v455 = vsub.s32 %v452, %v454
    %v456 = vrot.slane %v448, %v455
    %v458 = vunpack.c.l.s4 1983009808
    %v459 = vunpack.c.0.s8 %v458
    %v460 = vlaneseq
    %v461 = vshrl.u32 %v460, 7
    %v462 = vsub.s32 %v459, %v461
    %v463 = vrot.slane %v449, %v462
    %v464 = vcombine.low %v431, %v443
    %v465 = vcombine.high %v431, %v443
    %v467 = vunpack.c.l.s4 1983009808
    %v468 = vunpack.c.0.s8 %v467
    %v469 = vlaneseq
    %v470 = vshrl.u32 %v469, 7
    %v471 = vsub.s32 %v468, %v470
    %v472 = vrot.slane %v464, %v471
    %v474 = vunpack.c.l.s4 1983009808
    %v475 = vunpack.c.0.s8 %v474
    %v476 = vlaneseq
    %v477 = vshrl.u32 %v476, 7
    %v478 = vsub.s32 %v475, %v477
    %v479 = vrot.slane %v465, %v478
    %v480 = vcombine.low %v456, %v472
    %v481 = vcombine.high %v456, %v472
    %v483 = vunpack.c.l.s4 1934713408
    %v484 = vunpack.c.0.s8 %v483
    %v485 = vlaneseq
    %v486 = vshrl.u32 %v485, 7
    %v487 = vsub.s32 %v484, %v486
    %v488 = vrot.slane %v480, %v487
    %v490 = vunpack.c.l.s4 1934713408
    %v491 = vunpack.c.0.s8 %v490
    %v492 = vlaneseq
    %v493 = vshrl.u32 %v492, 7
    %v494 = vsub.s32 %v491, %v493
    %v495 = vrot.slane %v481, %v494
    %v496 = vcombine.low %v463, %v479
    %v497 = vcombine.high %v463, %v479
    %v499 = vunpack.c.l.s4 1934713408
    %v500 = vunpack.c.0.s8 %v499
    %v501 = vlaneseq
    %v502 = vshrl.u32 %v501, 7
    %v503 = vsub.s32 %v500, %v502
    %v504 = vrot.slane %v496, %v503
    %v506 = vunpack.c.l.s4 1934713408
    %v507 = vunpack.c.0.s8 %v506
    %v508 = vlaneseq
    %v509 = vshrl.u32 %v508, 7
    %v510 = vsub.s32 %v507, %v509
    %v511 = vrot.slane %v497, %v510
    %v512 = vcombine.high %v488, 0.0
    %v513 = vcombine.high %v495, 0.0
    %v514 = vcombine.high %v504, 0.0
    %v515 = vcombine.high %v511, 0.0
    %v516 = vcombine.low %v427, %v439
    %v517 = vcombine.high %v427, %v439
    %v519 = vunpack.c.l.s4 1983009808
    %v520 = vunpack.c.0.s8 %v519
    %v521 = vlaneseq
    %v522 = vshrl.u32 %v521, 7
    %v523 = vsub.s32 %v520, %v522
    %v524 = vrot.slane %v516, %v523
    %v526 = vunpack.c.l.s4 1983009808
    %v527 = vunpack.c.0.s8 %v526
    %v528 = vlaneseq
    %v529 = vshrl.u32 %v528, 7
    %v530 = vsub.s32 %v527, %v529
    %v531 = vrot.slane %v517, %v530
    %v532 = vcombine.low %v433, %v445
    %v533 = vcombine.high %v433, %v445
    %v535 = vunpack.c.l.s4 1983009808
    %v536 = vunpack.c.0.s8 %v535
    %v537 = vlaneseq
    %v538 = vshrl.u32 %v537, 7
    %v539 = vsub.s32 %v536, %v538
    %v540 = vrot.slane %v532, %v539
    %v542 = vunpack.c.l.s4 1983009808
    %v543 = vunpack.c.0.s8 %v542
    %v544 = vlaneseq
    %v545 = vshrl.u32 %v544, 7
    %v546 = vsub.s32 %v543, %v545
    %v547 = vrot.slane %v533, %v546
    %v548 = vcombine.low %v524, %v540
    %v549 = vcombine.high %v524, %v540
    %v551 = vunpack.c.l.s4 1934713408
    %v552 = vunpack.c.0.s8 %v551
    %v553 = vlaneseq
    %v554 = vshrl.u32 %v553, 7
    %v555 = vsub.s32 %v552, %v554
    %v556 = vrot.slane %v548, %v555
    %v558 = vunpack.c.l.s4 1934713408
    %v559 = vunpack.c.0.s8 %v558
    %v560 = vlaneseq
    %v561 = vshrl.u32 %v560, 7
    %v562 = vsub.s32 %v559, %v561
    %v563 = vrot.slane %v549, %v562
    %v564 = vcombine.low %v531, %v547
    %v565 = vcombine.high %v531, %v547
    %v567 = vunpack.c.l.s4 1934713408
    %v568 = vunpack.c.0.s8 %v567
    %v569 = vlaneseq
    %v570 = vshrl.u32 %v569, 7
    %v571 = vsub.s32 %v568, %v570
    %v572 = vrot.slane %v564, %v571
    %v574 = vunpack.c.l.s4 1934713408
    %v575 = vunpack.c.0.s8 %v574
    %v576 = vlaneseq
    %v577 = vshrl.u32 %v576, 7
    %v578 = vsub.s32 %v575, %v577
    %v579 = vrot.slane %v565, %v578
    %v580 = vcombine.high %v556, 0.0
    %v581 = vcombine.high %v563, 0.0
    %v582 = vcombine.high %v572, 0.0
    %v583 = vcombine.high %v579, 0.0
    %v584 = vcombine.low %v488, %v495
    %v586 = vunpack.c.l.s4 1983009808
    %v587 = vunpack.c.0.s8 %v586
    %v588 = vlaneseq
    %v589 = vshrl.u32 %v588, 7
    %v590 = vsub.s32 %v587, %v589
    %v591 = vrot.slane %v584, %v590
    %v592 = vcombine.low %v512, %v513
    %v594 = vunpack.c.l.s4 1983009808
    %v595 = vunpack.c.0.s8 %v594
    %v596 = vlaneseq
    %v597 = vshrl.u32 %v596, 7
    %v598 = vsub.s32 %v595, %v597
    %v599 = vrot.slane %v592, %v598
    %v600 = vcombine.low %v504, %v511
    %v602 = vunpack.c.l.s4 1983009808
    %v603 = vunpack.c.0.s8 %v602
    %v604 = vlaneseq
    %v605 = vshrl.u32 %v604, 7
    %v606 = vsub.s32 %v603, %v605
    %v607 = vrot.slane %v600, %v606
    %v608 = vcombine.low %v514, %v515
    %v610 = vunpack.c.l.s4 1983009808
    %v611 = vunpack.c.0.s8 %v610
    %v612 = vlaneseq
    %v613 = vshrl.u32 %v612, 7
    %v614 = vsub.s32 %v611, %v613
    %v615 = vrot.slane %v608, %v614
    %v616 = vcombine.low %v591, %v599
    %v617 = vcombine.high %v591, %v599
    %v619 = vunpack.c.l.s4 1934713408
    %v620 = vunpack.c.0.s8 %v619
    %v621 = vlaneseq
    %v622 = vshrl.u32 %v621, 7
    %v623 = vsub.s32 %v620, %v622
    %v624 = vrot.slane %v616, %v623
    %v626 = vunpack.c.l.s4 1934713408
    %v627 = vunpack.c.0.s8 %v626
    %v628 = vlaneseq
    %v629 = vshrl.u32 %v628, 7
    %v630 = vsub.s32 %v627, %v629
    %v631 = vrot.slane %v617, %v630
    %v632 = vcombine.low %v607, %v615
    %v633 = vcombine.high %v607, %v615
    %v635 = vunpack.c.l.s4 1934713408
    %v636 = vunpack.c.0.s8 %v635
    %v637 = vlaneseq
    %v638 = vshrl.u32 %v637, 7
    %v639 = vsub.s32 %v636, %v638
    %v640 = vrot.slane %v632, %v639
    %v642 = vunpack.c.l.s4 1934713408
    %v643 = vunpack.c.0.s8 %v642
    %v644 = vlaneseq
    %v645 = vshrl.u32 %v644, 7
    %v646 = vsub.s32 %v643, %v645
    %v647 = vrot.slane %v633, %v646
    %v648 = vcombine.low %v624, %v640
    %v649 = vcombine.high %v624, %v640
    %v650 = vcombine.low %v631, %v647
    %v651 = vcombine.high %v631, %v647
    %v652 = vcombine.low %v556, %v563
    %v654 = vunpack.c.l.s4 1983009808
    %v655 = vunpack.c.0.s8 %v654
    %v656 = vlaneseq
    %v657 = vshrl.u32 %v656, 7
    %v658 = vsub.s32 %v655, %v657
    %v659 = vrot.slane %v652, %v658
    %v660 = vcombine.low %v580, %v581
    %v662 = vunpack.c.l.s4 1983009808
    %v663 = vunpack.c.0.s8 %v662
    %v664 = vlaneseq
    %v665 = vshrl.u32 %v664, 7
    %v666 = vsub.s32 %v663, %v665
    %v667 = vrot.slane %v660, %v666
    %v668 = vcombine.low %v572, %v579
    %v670 = vunpack.c.l.s4 1983009808
    %v671 = vunpack.c.0.s8 %v670
    %v672 = vlaneseq
    %v673 = vshrl.u32 %v672, 7
    %v674 = vsub.s32 %v671, %v673
    %v675 = vrot.slane %v668, %v674
    %v676 = vcombine.low %v582, %v583
    %v678 = vunpack.c.l.s4 1983009808
    %v679 = vunpack.c.0.s8 %v678
    %v680 = vlaneseq
    %v681 = vshrl.u32 %v680, 7
    %v682 = vsub.s32 %v679, %v681
    %v683 = vrot.slane %v676, %v682
    %v684 = vcombine.low %v659, %v667
    %v685 = vcombine.high %v659, %v667
    %v687 = vunpack.c.l.s4 1934713408
    %v688 = vunpack.c.0.s8 %v687
    %v689 = vlaneseq
    %v690 = vshrl.u32 %v689, 7
    %v691 = vsub.s32 %v688, %v690
    %v692 = vrot.slane %v684, %v691
    %v694 = vunpack.c.l.s4 1934713408
    %v695 = vunpack.c.0.s8 %v694
    %v696 = vlaneseq
    %v697 = vshrl.u32 %v696, 7
    %v698 = vsub.s32 %v695, %v697
    %v699 = vrot.slane %v685, %v698
    %v700 = vcombine.low %v675, %v683
    %v701 = vcombine.high %v675, %v683
    %v703 = vunpack.c.l.s4 1934713408
    %v704 = vunpack.c.0.s8 %v703
    %v705 = vlaneseq
    %v706 = vshrl.u32 %v705, 7
    %v707 = vsub.s32 %v704, %v706
    %v708 = vrot.slane %v700, %v707
    %v710 = vunpack.c.l.s4 1934713408
    %v711 = vunpack.c.0.s8 %v710
    %v712 = vlaneseq
    %v713 = vshrl.u32 %v712, 7
    %v714 = vsub.s32 %v711, %v713
    %v715 = vrot.slane %v701, %v714
    %v716 = vcombine.low %v692, %v708
    %v717 = vcombine.high %v692, %v708
    %v718 = vcombine.low %v699, %v715
    %v719 = vcombine.high %v699, %v715
    %720 = vrot.lane.b32.xlu0 %v426, 96
    %v721 = vpop.permute.xlu0 %720
    %722 = vrot.lane.b32.xlu0 %v427, 96
    %v723 = vpop.permute.xlu0 %722
    %724 = vrot.lane.b32.xlu0 %v431, 96
    %v725 = vpop.permute.xlu0 %724
    %726 = vrot.lane.b32.xlu0 %v433, 96
    %v727 = vpop.permute.xlu0 %726
    %728 = vrot.lane.b32.xlu0 %v437, 96
    %v729 = vpop.permute.xlu0 %728
    %730 = vrot.lane.b32.xlu0 %v439, 96
    %v731 = vpop.permute.xlu0 %730
    %732 = vrot.lane.b32.xlu0 %v443, 96
    %v733 = vpop.permute.xlu0 %732
    %734 = vrot.lane.b32.xlu0 %v445, 96
    %v735 = vpop.permute.xlu0 %734
    %v744 = vcombine.low %v721, %v729
    %v745 = vcombine.high %v721, %v729
    %v747 = vunpack.c.l.s4 1983009808
    %v748 = vunpack.c.0.s8 %v747
    %v749 = vlaneseq
    %v750 = vshrl.u32 %v749, 7
    %v751 = vsub.s32 %v748, %v750
    %v752 = vrot.slane %v744, %v751
    %v754 = vunpack.c.l.s4 1983009808
    %v755 = vunpack.c.0.s8 %v754
    %v756 = vlaneseq
    %v757 = vshrl.u32 %v756, 7
    %v758 = vsub.s32 %v755, %v757
    %v759 = vrot.slane %v745, %v758
    %v760 = vcombine.low %v725, %v733
    %v761 = vcombine.high %v725, %v733
    %v763 = vunpack.c.l.s4 1983009808
    %v764 = vunpack.c.0.s8 %v763
    %v765 = vlaneseq
    %v766 = vshrl.u32 %v765, 7
    %v767 = vsub.s32 %v764, %v766
    %v768 = vrot.slane %v760, %v767
    %v770 = vunpack.c.l.s4 1983009808
    %v771 = vunpack.c.0.s8 %v770
    %v772 = vlaneseq
    %v773 = vshrl.u32 %v772, 7
    %v774 = vsub.s32 %v771, %v773
    %v775 = vrot.slane %v761, %v774
    %v776 = vcombine.low %v752, %v768
    %v777 = vcombine.high %v752, %v768
    %v779 = vunpack.c.l.s4 1934713408
    %v780 = vunpack.c.0.s8 %v779
    %v781 = vlaneseq
    %v782 = vshrl.u32 %v781, 7
    %v783 = vsub.s32 %v780, %v782
    %v784 = vrot.slane %v776, %v783
    %v786 = vunpack.c.l.s4 1934713408
    %v787 = vunpack.c.0.s8 %v786
    %v788 = vlaneseq
    %v789 = vshrl.u32 %v788, 7
    %v790 = vsub.s32 %v787, %v789
    %v791 = vrot.slane %v777, %v790
    %v792 = vcombine.low %v759, %v775
    %v793 = vcombine.high %v759, %v775
    %v795 = vunpack.c.l.s4 1934713408
    %v796 = vunpack.c.0.s8 %v795
    %v797 = vlaneseq
    %v798 = vshrl.u32 %v797, 7
    %v799 = vsub.s32 %v796, %v798
    %v800 = vrot.slane %v792, %v799
    %v802 = vunpack.c.l.s4 1934713408
    %v803 = vunpack.c.0.s8 %v802
    %v804 = vlaneseq
    %v805 = vshrl.u32 %v804, 7
    %v806 = vsub.s32 %v803, %v805
    %v807 = vrot.slane %v793, %v806
    %v808 = vcombine.high %v784, 0.0
    %v809 = vcombine.high %v791, 0.0
    %v810 = vcombine.high %v800, 0.0
    %v811 = vcombine.high %v807, 0.0
    %v812 = vcombine.low %v723, %v731
    %v813 = vcombine.high %v723, %v731
    %v815 = vunpack.c.l.s4 1983009808
    %v816 = vunpack.c.0.s8 %v815
    %v817 = vlaneseq
    %v818 = vshrl.u32 %v817, 7
    %v819 = vsub.s32 %v816, %v818
    %v820 = vrot.slane %v812, %v819
    %v822 = vunpack.c.l.s4 1983009808
    %v823 = vunpack.c.0.s8 %v822
    %v824 = vlaneseq
    %v825 = vshrl.u32 %v824, 7
    %v826 = vsub.s32 %v823, %v825
    %v827 = vrot.slane %v813, %v826
    %v828 = vcombine.low %v727, %v735
    %v829 = vcombine.high %v727, %v735
    %v831 = vunpack.c.l.s4 1983009808
    %v832 = vunpack.c.0.s8 %v831
    %v833 = vlaneseq
    %v834 = vshrl.u32 %v833, 7
    %v835 = vsub.s32 %v832, %v834
    %v836 = vrot.slane %v828, %v835
    %v838 = vunpack.c.l.s4 1983009808
    %v839 = vunpack.c.0.s8 %v838
    %v840 = vlaneseq
    %v841 = vshrl.u32 %v840, 7
    %v842 = vsub.s32 %v839, %v841
    %v843 = vrot.slane %v829, %v842
    %v844 = vcombine.low %v820, %v836
    %v845 = vcombine.high %v820, %v836
    %v847 = vunpack.c.l.s4 1934713408
    %v848 = vunpack.c.0.s8 %v847
    %v849 = vlaneseq
    %v850 = vshrl.u32 %v849, 7
    %v851 = vsub.s32 %v848, %v850
    %v852 = vrot.slane %v844, %v851
    %v854 = vunpack.c.l.s4 1934713408
    %v855 = vunpack.c.0.s8 %v854
    %v856 = vlaneseq
    %v857 = vshrl.u32 %v856, 7
    %v858 = vsub.s32 %v855, %v857
    %v859 = vrot.slane %v845, %v858
    %v860 = vcombine.low %v827, %v843
    %v861 = vcombine.high %v827, %v843
    %v863 = vunpack.c.l.s4 1934713408
    %v864 = vunpack.c.0.s8 %v863
    %v865 = vlaneseq
    %v866 = vshrl.u32 %v865, 7
    %v867 = vsub.s32 %v864, %v866
    %v868 = vrot.slane %v860, %v867
    %v870 = vunpack.c.l.s4 1934713408
    %v871 = vunpack.c.0.s8 %v870
    %v872 = vlaneseq
    %v873 = vshrl.u32 %v872, 7
    %v874 = vsub.s32 %v871, %v873
    %v875 = vrot.slane %v861, %v874
    %v876 = vcombine.high %v852, 0.0
    %v877 = vcombine.high %v859, 0.0
    %v878 = vcombine.high %v868, 0.0
    %v879 = vcombine.high %v875, 0.0
    %v880 = vcombine.low %v784, %v791
    %v882 = vunpack.c.l.s4 1983009808
    %v883 = vunpack.c.0.s8 %v882
    %v884 = vlaneseq
    %v885 = vshrl.u32 %v884, 7
    %v886 = vsub.s32 %v883, %v885
    %v887 = vrot.slane %v880, %v886
    %v888 = vcombine.low %v808, %v809
    %v890 = vunpack.c.l.s4 1983009808
    %v891 = vunpack.c.0.s8 %v890
    %v892 = vlaneseq
    %v893 = vshrl.u32 %v892, 7
    %v894 = vsub.s32 %v891, %v893
    %v895 = vrot.slane %v888, %v894
    %v896 = vcombine.low %v800, %v807
    %v898 = vunpack.c.l.s4 1983009808
    %v899 = vunpack.c.0.s8 %v898
    %v900 = vlaneseq
    %v901 = vshrl.u32 %v900, 7
    %v902 = vsub.s32 %v899, %v901
    %v903 = vrot.slane %v896, %v902
    %v904 = vcombine.low %v810, %v811
    %v906 = vunpack.c.l.s4 1983009808
    %v907 = vunpack.c.0.s8 %v906
    %v908 = vlaneseq
    %v909 = vshrl.u32 %v908, 7
    %v910 = vsub.s32 %v907, %v909
    %v911 = vrot.slane %v904, %v910
    %v912 = vcombine.low %v887, %v895
    %v913 = vcombine.high %v887, %v895
    %v915 = vunpack.c.l.s4 1934713408
    %v916 = vunpack.c.0.s8 %v915
    %v917 = vlaneseq
    %v918 = vshrl.u32 %v917, 7
    %v919 = vsub.s32 %v916, %v918
    %v920 = vrot.slane %v912, %v919
    %v922 = vunpack.c.l.s4 1934713408
    %v923 = vunpack.c.0.s8 %v922
    %v924 = vlaneseq
    %v925 = vshrl.u32 %v924, 7
    %v926 = vsub.s32 %v923, %v925
    %v927 = vrot.slane %v913, %v926
    %v928 = vcombine.low %v903, %v911
    %v929 = vcombine.high %v903, %v911
    %v931 = vunpack.c.l.s4 1934713408
    %v932 = vunpack.c.0.s8 %v931
    %v933 = vlaneseq
    %v934 = vshrl.u32 %v933, 7
    %v935 = vsub.s32 %v932, %v934
    %v936 = vrot.slane %v928, %v935
    %v938 = vunpack.c.l.s4 1934713408
    %v939 = vunpack.c.0.s8 %v938
    %v940 = vlaneseq
    %v941 = vshrl.u32 %v940, 7
    %v942 = vsub.s32 %v939, %v941
    %v943 = vrot.slane %v929, %v942
    %v944 = vcombine.low %v920, %v936
    %v945 = vcombine.high %v920, %v936
    %v946 = vcombine.low %v927, %v943
    %v947 = vcombine.high %v927, %v943
    %v948 = vcombine.low %v852, %v859
    %v950 = vunpack.c.l.s4 1983009808
    %v951 = vunpack.c.0.s8 %v950
    %v952 = vlaneseq
    %v953 = vshrl.u32 %v952, 7
    %v954 = vsub.s32 %v951, %v953
    %v955 = vrot.slane %v948, %v954
    %v956 = vcombine.low %v876, %v877
    %v958 = vunpack.c.l.s4 1983009808
    %v959 = vunpack.c.0.s8 %v958
    %v960 = vlaneseq
    %v961 = vshrl.u32 %v960, 7
    %v962 = vsub.s32 %v959, %v961
    %v963 = vrot.slane %v956, %v962
    %v964 = vcombine.low %v868, %v875
    %v966 = vunpack.c.l.s4 1983009808
    %v967 = vunpack.c.0.s8 %v966
    %v968 = vlaneseq
    %v969 = vshrl.u32 %v968, 7
    %v970 = vsub.s32 %v967, %v969
    %v971 = vrot.slane %v964, %v970
    %v972 = vcombine.low %v878, %v879
    %v974 = vunpack.c.l.s4 1983009808
    %v975 = vunpack.c.0.s8 %v974
    %v976 = vlaneseq
    %v977 = vshrl.u32 %v976, 7
    %v978 = vsub.s32 %v975, %v977
    %v979 = vrot.slane %v972, %v978
    %v980 = vcombine.low %v955, %v963
    %v981 = vcombine.high %v955, %v963
    %v983 = vunpack.c.l.s4 1934713408
    %v984 = vunpack.c.0.s8 %v983
    %v985 = vlaneseq
    %v986 = vshrl.u32 %v985, 7
    %v987 = vsub.s32 %v984, %v986
    %v988 = vrot.slane %v980, %v987
    %v990 = vunpack.c.l.s4 1934713408
    %v991 = vunpack.c.0.s8 %v990
    %v992 = vlaneseq
    %v993 = vshrl.u32 %v992, 7
    %v994 = vsub.s32 %v991, %v993
    %v995 = vrot.slane %v981, %v994
    %v996 = vcombine.low %v971, %v979
    %v997 = vcombine.high %v971, %v979
    %v999 = vunpack.c.l.s4 1934713408
    %v1000 = vunpack.c.0.s8 %v999
    %v1001 = vlaneseq
    %v1002 = vshrl.u32 %v1001, 7
    %v1003 = vsub.s32 %v1000, %v1002
    %v1004 = vrot.slane %v996, %v1003
    %v1006 = vunpack.c.l.s4 1934713408
    %v1007 = vunpack.c.0.s8 %v1006
    %v1008 = vlaneseq
    %v1009 = vshrl.u32 %v1008, 7
    %v1010 = vsub.s32 %v1007, %v1009
    %v1011 = vrot.slane %v997, %v1010
    %v1012 = vcombine.low %v988, %v1004
    %v1013 = vcombine.high %v988, %v1004
    %v1014 = vcombine.low %v995, %v1011
    %v1015 = vcombine.high %v995, %v1011
    %1016 = vrot.lane.b32.xlu0 %v161, 120
    %v1017 = vpop.permute.xlu0 %1016
    %1018 = vrot.lane.b32.xlu0 %v166, 120
    %v1019 = vpop.permute.xlu0 %1018
    %1020 = vrot.lane.b32.xlu0 %v161, 112
    %v1021 = vpop.permute.xlu0 %1020
    %1022 = vrot.lane.b32.xlu0 %v166, 112
    %v1023 = vpop.permute.xlu0 %1022
    %1024 = vrot.lane.b32.xlu0 %v161, 104
    %v1025 = vpop.permute.xlu0 %1024
    %1026 = vrot.lane.b32.xlu0 %v166, 104
    %v1027 = vpop.permute.xlu0 %1026
    %1028 = vrot.lane.b32.xlu0 %v161, 64
    %v1029 = vpop.permute.xlu0 %1028
    %1030 = vrot.lane.b32.xlu0 %v166, 64
    %v1031 = vpop.permute.xlu0 %1030
    %1032 = vrot.lane.b32.xlu0 %v1017, 64
    %v1033 = vpop.permute.xlu0 %1032
    %1034 = vrot.lane.b32.xlu0 %v1019, 64
    %v1035 = vpop.permute.xlu0 %1034
    %1036 = vrot.lane.b32.xlu0 %v1021, 64
    %v1037 = vpop.permute.xlu0 %1036
    %1038 = vrot.lane.b32.xlu0 %v1023, 64
    %v1039 = vpop.permute.xlu0 %1038
    %1040 = vrot.lane.b32.xlu0 %v1025, 64
    %v1041 = vpop.permute.xlu0 %1040
    %1042 = vrot.lane.b32.xlu0 %v1027, 64
    %v1043 = vpop.permute.xlu0 %1042
    %v1052 = vcombine.low %v1029, %v1037
    %v1053 = vcombine.high %v1029, %v1037
    %v1055 = vunpack.c.l.s4 1983009808
    %v1056 = vunpack.c.0.s8 %v1055
    %v1057 = vlaneseq
    %v1058 = vshrl.u32 %v1057, 7
    %v1059 = vsub.s32 %v1056, %v1058
    %v1060 = vrot.slane %v1052, %v1059
    %v1062 = vunpack.c.l.s4 1983009808
    %v1063 = vunpack.c.0.s8 %v1062
    %v1064 = vlaneseq
    %v1065 = vshrl.u32 %v1064, 7
    %v1066 = vsub.s32 %v1063, %v1065
    %v1067 = vrot.slane %v1053, %v1066
    %v1068 = vcombine.low %v1033, %v1041
    %v1069 = vcombine.high %v1033, %v1041
    %v1071 = vunpack.c.l.s4 1983009808
    %v1072 = vunpack.c.0.s8 %v1071
    %v1073 = vlaneseq
    %v1074 = vshrl.u32 %v1073, 7
    %v1075 = vsub.s32 %v1072, %v1074
    %v1076 = vrot.slane %v1068, %v1075
    %v1078 = vunpack.c.l.s4 1983009808
    %v1079 = vunpack.c.0.s8 %v1078
    %v1080 = vlaneseq
    %v1081 = vshrl.u32 %v1080, 7
    %v1082 = vsub.s32 %v1079, %v1081
    %v1083 = vrot.slane %v1069, %v1082
    %v1084 = vcombine.low %v1060, %v1076
    %v1085 = vcombine.high %v1060, %v1076
    %v1087 = vunpack.c.l.s4 1934713408
    %v1088 = vunpack.c.0.s8 %v1087
    %v1089 = vlaneseq
    %v1090 = vshrl.u32 %v1089, 7
    %v1091 = vsub.s32 %v1088, %v1090
    %v1092 = vrot.slane %v1084, %v1091
    %v1094 = vunpack.c.l.s4 1934713408
    %v1095 = vunpack.c.0.s8 %v1094
    %v1096 = vlaneseq
    %v1097 = vshrl.u32 %v1096, 7
    %v1098 = vsub.s32 %v1095, %v1097
    %v1099 = vrot.slane %v1085, %v1098
    %v1100 = vcombine.low %v1067, %v1083
    %v1101 = vcombine.high %v1067, %v1083
    %v1103 = vunpack.c.l.s4 1934713408
    %v1104 = vunpack.c.0.s8 %v1103
    %v1105 = vlaneseq
    %v1106 = vshrl.u32 %v1105, 7
    %v1107 = vsub.s32 %v1104, %v1106
    %v1108 = vrot.slane %v1100, %v1107
    %v1110 = vunpack.c.l.s4 1934713408
    %v1111 = vunpack.c.0.s8 %v1110
    %v1112 = vlaneseq
    %v1113 = vshrl.u32 %v1112, 7
    %v1114 = vsub.s32 %v1111, %v1113
    %v1115 = vrot.slane %v1101, %v1114
    %v1116 = vcombine.high %v1092, 0.0
    %v1117 = vcombine.high %v1099, 0.0
    %v1118 = vcombine.high %v1108, 0.0
    %v1119 = vcombine.high %v1115, 0.0
    %v1120 = vcombine.low %v1031, %v1039
    %v1121 = vcombine.high %v1031, %v1039
    %v1123 = vunpack.c.l.s4 1983009808
    %v1124 = vunpack.c.0.s8 %v1123
    %v1125 = vlaneseq
    %v1126 = vshrl.u32 %v1125, 7
    %v1127 = vsub.s32 %v1124, %v1126
    %v1128 = vrot.slane %v1120, %v1127
    %v1130 = vunpack.c.l.s4 1983009808
    %v1131 = vunpack.c.0.s8 %v1130
    %v1132 = vlaneseq
    %v1133 = vshrl.u32 %v1132, 7
    %v1134 = vsub.s32 %v1131, %v1133
    %v1135 = vrot.slane %v1121, %v1134
    %v1136 = vcombine.low %v1035, %v1043
    %v1137 = vcombine.high %v1035, %v1043
    %v1139 = vunpack.c.l.s4 1983009808
    %v1140 = vunpack.c.0.s8 %v1139
    %v1141 = vlaneseq
    %v1142 = vshrl.u32 %v1141, 7
    %v1143 = vsub.s32 %v1140, %v1142
    %v1144 = vrot.slane %v1136, %v1143
    %v1146 = vunpack.c.l.s4 1983009808
    %v1147 = vunpack.c.0.s8 %v1146
    %v1148 = vlaneseq
    %v1149 = vshrl.u32 %v1148, 7
    %v1150 = vsub.s32 %v1147, %v1149
    %v1151 = vrot.slane %v1137, %v1150
    %v1152 = vcombine.low %v1128, %v1144
    %v1153 = vcombine.high %v1128, %v1144
    %v1155 = vunpack.c.l.s4 1934713408
    %v1156 = vunpack.c.0.s8 %v1155
    %v1157 = vlaneseq
    %v1158 = vshrl.u32 %v1157, 7
    %v1159 = vsub.s32 %v1156, %v1158
    %v1160 = vrot.slane %v1152, %v1159
    %v1162 = vunpack.c.l.s4 1934713408
    %v1163 = vunpack.c.0.s8 %v1162
    %v1164 = vlaneseq
    %v1165 = vshrl.u32 %v1164, 7
    %v1166 = vsub.s32 %v1163, %v1165
    %v1167 = vrot.slane %v1153, %v1166
    %v1168 = vcombine.low %v1135, %v1151
    %v1169 = vcombine.high %v1135, %v1151
    %v1171 = vunpack.c.l.s4 1934713408
    %v1172 = vunpack.c.0.s8 %v1171
    %v1173 = vlaneseq
    %v1174 = vshrl.u32 %v1173, 7
    %v1175 = vsub.s32 %v1172, %v1174
    %v1176 = vrot.slane %v1168, %v1175
    %v1178 = vunpack.c.l.s4 1934713408
    %v1179 = vunpack.c.0.s8 %v1178
    %v1180 = vlaneseq
    %v1181 = vshrl.u32 %v1180, 7
    %v1182 = vsub.s32 %v1179, %v1181
    %v1183 = vrot.slane %v1169, %v1182
    %v1184 = vcombine.high %v1160, 0.0
    %v1185 = vcombine.high %v1167, 0.0
    %v1186 = vcombine.high %v1176, 0.0
    %v1187 = vcombine.high %v1183, 0.0
    %v1188 = vcombine.low %v1092, %v1099
    %v1190 = vunpack.c.l.s4 1983009808
    %v1191 = vunpack.c.0.s8 %v1190
    %v1192 = vlaneseq
    %v1193 = vshrl.u32 %v1192, 7
    %v1194 = vsub.s32 %v1191, %v1193
    %v1195 = vrot.slane %v1188, %v1194
    %v1196 = vcombine.low %v1116, %v1117
    %v1198 = vunpack.c.l.s4 1983009808
    %v1199 = vunpack.c.0.s8 %v1198
    %v1200 = vlaneseq
    %v1201 = vshrl.u32 %v1200, 7
    %v1202 = vsub.s32 %v1199, %v1201
    %v1203 = vrot.slane %v1196, %v1202
    %v1204 = vcombine.low %v1108, %v1115
    %v1206 = vunpack.c.l.s4 1983009808
    %v1207 = vunpack.c.0.s8 %v1206
    %v1208 = vlaneseq
    %v1209 = vshrl.u32 %v1208, 7
    %v1210 = vsub.s32 %v1207, %v1209
    %v1211 = vrot.slane %v1204, %v1210
    %v1212 = vcombine.low %v1118, %v1119
    %v1214 = vunpack.c.l.s4 1983009808
    %v1215 = vunpack.c.0.s8 %v1214
    %v1216 = vlaneseq
    %v1217 = vshrl.u32 %v1216, 7
    %v1218 = vsub.s32 %v1215, %v1217
    %v1219 = vrot.slane %v1212, %v1218
    %v1220 = vcombine.low %v1195, %v1203
    %v1221 = vcombine.high %v1195, %v1203
    %v1223 = vunpack.c.l.s4 1934713408
    %v1224 = vunpack.c.0.s8 %v1223
    %v1225 = vlaneseq
    %v1226 = vshrl.u32 %v1225, 7
    %v1227 = vsub.s32 %v1224, %v1226
    %v1228 = vrot.slane %v1220, %v1227
    %v1230 = vunpack.c.l.s4 1934713408
    %v1231 = vunpack.c.0.s8 %v1230
    %v1232 = vlaneseq
    %v1233 = vshrl.u32 %v1232, 7
    %v1234 = vsub.s32 %v1231, %v1233
    %v1235 = vrot.slane %v1221, %v1234
    %v1236 = vcombine.low %v1211, %v1219
    %v1237 = vcombine.high %v1211, %v1219
    %v1239 = vunpack.c.l.s4 1934713408
    %v1240 = vunpack.c.0.s8 %v1239
    %v1241 = vlaneseq
    %v1242 = vshrl.u32 %v1241, 7
    %v1243 = vsub.s32 %v1240, %v1242
    %v1244 = vrot.slane %v1236, %v1243
    %v1246 = vunpack.c.l.s4 1934713408
    %v1247 = vunpack.c.0.s8 %v1246
    %v1248 = vlaneseq
    %v1249 = vshrl.u32 %v1248, 7
    %v1250 = vsub.s32 %v1247, %v1249
    %v1251 = vrot.slane %v1237, %v1250
    %v1252 = vcombine.low %v1228, %v1244
    %v1253 = vcombine.high %v1228, %v1244
    %v1254 = vcombine.low %v1235, %v1251
    %v1255 = vcombine.high %v1235, %v1251
    %v1256 = vcombine.low %v1160, %v1167
    %v1258 = vunpack.c.l.s4 1983009808
    %v1259 = vunpack.c.0.s8 %v1258
    %v1260 = vlaneseq
    %v1261 = vshrl.u32 %v1260, 7
    %v1262 = vsub.s32 %v1259, %v1261
    %v1263 = vrot.slane %v1256, %v1262
    %v1264 = vcombine.low %v1184, %v1185
    %v1266 = vunpack.c.l.s4 1983009808
    %v1267 = vunpack.c.0.s8 %v1266
    %v1268 = vlaneseq
    %v1269 = vshrl.u32 %v1268, 7
    %v1270 = vsub.s32 %v1267, %v1269
    %v1271 = vrot.slane %v1264, %v1270
    %v1272 = vcombine.low %v1176, %v1183
    %v1274 = vunpack.c.l.s4 1983009808
    %v1275 = vunpack.c.0.s8 %v1274
    %v1276 = vlaneseq
    %v1277 = vshrl.u32 %v1276, 7
    %v1278 = vsub.s32 %v1275, %v1277
    %v1279 = vrot.slane %v1272, %v1278
    %v1280 = vcombine.low %v1186, %v1187
    %v1282 = vunpack.c.l.s4 1983009808
    %v1283 = vunpack.c.0.s8 %v1282
    %v1284 = vlaneseq
    %v1285 = vshrl.u32 %v1284, 7
    %v1286 = vsub.s32 %v1283, %v1285
    %v1287 = vrot.slane %v1280, %v1286
    %v1288 = vcombine.low %v1263, %v1271
    %v1289 = vcombine.high %v1263, %v1271
    %v1291 = vunpack.c.l.s4 1934713408
    %v1292 = vunpack.c.0.s8 %v1291
    %v1293 = vlaneseq
    %v1294 = vshrl.u32 %v1293, 7
    %v1295 = vsub.s32 %v1292, %v1294
    %v1296 = vrot.slane %v1288, %v1295
    %v1298 = vunpack.c.l.s4 1934713408
    %v1299 = vunpack.c.0.s8 %v1298
    %v1300 = vlaneseq
    %v1301 = vshrl.u32 %v1300, 7
    %v1302 = vsub.s32 %v1299, %v1301
    %v1303 = vrot.slane %v1289, %v1302
    %v1304 = vcombine.low %v1279, %v1287
    %v1305 = vcombine.high %v1279, %v1287
    %v1307 = vunpack.c.l.s4 1934713408
    %v1308 = vunpack.c.0.s8 %v1307
    %v1309 = vlaneseq
    %v1310 = vshrl.u32 %v1309, 7
    %v1311 = vsub.s32 %v1308, %v1310
    %v1312 = vrot.slane %v1304, %v1311
    %v1314 = vunpack.c.l.s4 1934713408
    %v1315 = vunpack.c.0.s8 %v1314
    %v1316 = vlaneseq
    %v1317 = vshrl.u32 %v1316, 7
    %v1318 = vsub.s32 %v1315, %v1317
    %v1319 = vrot.slane %v1305, %v1318
    %v1320 = vcombine.low %v1296, %v1312
    %v1321 = vcombine.high %v1296, %v1312
    %v1322 = vcombine.low %v1303, %v1319
    %v1323 = vcombine.high %v1303, %v1319
    %v1325 = vsel %vm344, %v648, 0
    %v1328 = vsel %vm344, %v716, 0
    %v1331 = vsel %vm344, %v944, 0
    %v1334 = vsel %vm344, %v1012, 0
    %1336 = vmatprep.subr.mxu0 0.0
    %1337 = vmatpush1.xpose.msra.mxu0 %v1331
    %1338 = vmatprep.subr.mxu0 0.0
    %1339 = vmatpush1.xpose.msra.mxu0 %v1334
    %1340 = vmatprep.subr.mxu0 0.0
    %1341 = vmatpush1.xpose.msra.mxu0 0.0
    %1342 = vmatprep.subr.mxu0 0.0
    %1343 = vmatpush1.xpose.msra.mxu0 0.0
    %1344 = vmatprep.subr.mxu0 0.0
    %1345 = vmatpush1.xpose.msra.mxu0 0.0
    %1346 = vmatprep.subr.mxu0 0.0
    %1347 = vmatpush1.xpose.msra.mxu0 0.0
    %1348 = vmatprep.subr.mxu0 0.0
    %1349 = vmatpush1.xpose.msra.mxu0 0.0
    %1350 = vmatprep.subr.mxu0 0.0
    %1351 = vmatpush1.xpose.msra.mxu0 0.0
    %1352 = vmatprep.subr.mxu0 0.0
    %1353 = vmatpush1.xpose.msra.mxu0 0.0
    %1354 = vmatprep.subr.mxu0 0.0
    %1355 = vmatpush1.xpose.msra.mxu0 0.0
    %1356 = vmatprep.subr.mxu0 0.0
    %1357 = vmatpush1.xpose.msra.mxu0 0.0
    %1358 = vmatprep.subr.mxu0 0.0
    %1359 = vmatpush1.xpose.msra.mxu0 0.0
    %1360 = vmatprep.subr.mxu0 0.0
    %1361 = vmatpush1.xpose.msra.mxu0 0.0
    %1362 = vmatprep.subr.mxu0 0.0
    %1363 = vmatpush1.xpose.msra.mxu0 0.0
    %1364 = vmatprep.subr.mxu0 0.0
    %1365 = vmatpush1.xpose.msra.mxu0 0.0
    %1366 = vmatprep.subr.mxu0 0.0
    %1367 = vmatpush1.xpose.msra.mxu0 0.0
    %1368 = vmatprep.subr.mxu0 0.0
    %1369 = vmatpush1.xpose.msra.mxu0 0.0
    %1370 = vmatprep.subr.mxu0 0.0
    %1371 = vmatpush1.xpose.msra.mxu0 0.0
    %1372 = vmatprep.subr.mxu0 0.0
    %1373 = vmatpush1.xpose.msra.mxu0 0.0
    %1374 = vmatprep.subr.mxu0 0.0
    %1375 = vmatpush1.xpose.msra.mxu0 0.0
    %1376 = vmatprep.subr.mxu0 0.0
    %1377 = vmatpush1.xpose.msra.mxu0 0.0
    %1378 = vmatprep.subr.mxu0 0.0
    %1379 = vmatpush1.xpose.msra.mxu0 0.0
    %1380 = vmatprep.subr.mxu0 0.0
    %1381 = vmatpush1.xpose.msra.mxu0 0.0
    %1382 = vmatprep.subr.mxu0 0.0
    %1383 = vmatpush1.xpose.msra.mxu0 0.0
    %1384 = vmatprep.subr.mxu0 0.0
    %1385 = vmatpush1.xpose.msra.mxu0 0.0
    %1386 = vmatprep.subr.mxu0 0.0
    %1387 = vmatpush1.xpose.msra.mxu0 0.0
    %1388 = vmatprep.subr.mxu0 0.0
    %1389 = vmatpush1.xpose.msra.mxu0 0.0
    %1390 = vmatprep.subr.mxu0 0.0
    %1391 = vmatpush1.xpose.msra.mxu0 0.0
    %1392 = vmatprep.subr.mxu0 0.0
    %1393 = vmatpush1.xpose.msra.mxu0 0.0
    %1394 = vmatprep.subr.mxu0 0.0
    %1395 = vmatpush1.xpose.msra.mxu0 0.0
    %1396 = vmatprep.subr.mxu0 0.0
    %1397 = vmatpush1.xpose.msra.mxu0 0.0
    %1398 = vmatprep.subr.mxu0 0.0
    %1399 = vmatpush1.xpose.msra.mxu0 0.0
    %1400 = vmatprep.mubr.f32.mxu0 0.0
    %1401 = vmatmul.mubr.f32.gmra.mrb[0].mxu0 %v1325
    %v1402 = vpop.f32.mrb[0].mxu0
    %v1403 = vadd.f32 %v83, %v1402
    %v1404 = vpop.f32.mrb[0].mxu0
    %1405 = vmatprep.mubr.f32.mxu0 0.0
    %1406 = vmatmul.mubr.f32.gmra.mrb[0].mxu0 %v1328
    %v1407 = vpop.f32.mrb[0].mxu0
    %v1408 = vadd.f32 %v84, %v1407
    %v1409 = vpop.f32.mrb[0].mxu0
    %1410 = vdwg.mxu0
    %v1412 = vsel %vm344, %v649, 0
    %v1415 = vsel %vm344, %v717, 0
    %v1418 = vsel %vm344, %v945, 0
    %v1421 = vsel %vm344, %v1013, 0
    %1423 = vmatprep.subr.mxu0 0.0
    %1424 = vmatpush1.xpose.msra.mxu0 %v1418
    %1425 = vmatprep.subr.mxu0 0.0
    %1426 = vmatpush1.xpose.msra.mxu0 %v1421
    %1427 = vmatprep.subr.mxu0 0.0
    %1428 = vmatpush1.xpose.msra.mxu0 0.0
    %1429 = vmatprep.subr.mxu0 0.0
    %1430 = vmatpush1.xpose.msra.mxu0 0.0
    %1431 = vmatprep.subr.mxu0 0.0
    %1432 = vmatpush1.xpose.msra.mxu0 0.0
    %1433 = vmatprep.subr.mxu0 0.0
    %1434 = vmatpush1.xpose.msra.mxu0 0.0
    %1435 = vmatprep.subr.mxu0 0.0
    %1436 = vmatpush1.xpose.msra.mxu0 0.0
    %1437 = vmatprep.subr.mxu0 0.0
    %1438 = vmatpush1.xpose.msra.mxu0 0.0
    %1439 = vmatprep.subr.mxu0 0.0
    %1440 = vmatpush1.xpose.msra.mxu0 0.0
    %1441 = vmatprep.subr.mxu0 0.0
    %1442 = vmatpush1.xpose.msra.mxu0 0.0
    %1443 = vmatprep.subr.mxu0 0.0
    %1444 = vmatpush1.xpose.msra.mxu0 0.0
    %1445 = vmatprep.subr.mxu0 0.0
    %1446 = vmatpush1.xpose.msra.mxu0 0.0
    %1447 = vmatprep.subr.mxu0 0.0
    %1448 = vmatpush1.xpose.msra.mxu0 0.0
    %1449 = vmatprep.subr.mxu0 0.0
    %1450 = vmatpush1.xpose.msra.mxu0 0.0
    %1451 = vmatprep.subr.mxu0 0.0
    %1452 = vmatpush1.xpose.msra.mxu0 0.0
    %1453 = vmatprep.subr.mxu0 0.0
    %1454 = vmatpush1.xpose.msra.mxu0 0.0
    %1455 = vmatprep.subr.mxu0 0.0
    %1456 = vmatpush1.xpose.msra.mxu0 0.0
    %1457 = vmatprep.subr.mxu0 0.0
    %1458 = vmatpush1.xpose.msra.mxu0 0.0
    %1459 = vmatprep.subr.mxu0 0.0
    %1460 = vmatpush1.xpose.msra.mxu0 0.0
    %1461 = vmatprep.subr.mxu0 0.0
    %1462 = vmatpush1.xpose.msra.mxu0 0.0
    %1463 = vmatprep.subr.mxu0 0.0
    %1464 = vmatpush1.xpose.msra.mxu0 0.0
    %1465 = vmatprep.subr.mxu0 0.0
    %1466 = vmatpush1.xpose.msra.mxu0 0.0
    %1467 = vmatprep.subr.mxu0 0.0
    %1468 = vmatpush1.xpose.msra.mxu0 0.0
    %1469 = vmatprep.subr.mxu0 0.0
    %1470 = vmatpush1.xpose.msra.mxu0 0.0
    %1471 = vmatprep.subr.mxu0 0.0
    %1472 = vmatpush1.xpose.msra.mxu0 0.0
    %1473 = vmatprep.subr.mxu0 0.0
    %1474 = vmatpush1.xpose.msra.mxu0 0.0
    %1475 = vmatprep.subr.mxu0 0.0
    %1476 = vmatpush1.xpose.msra.mxu0 0.0
    %1477 = vmatprep.subr.mxu0 0.0
    %1478 = vmatpush1.xpose.msra.mxu0 0.0
    %1479 = vmatprep.subr.mxu0 0.0
    %1480 = vmatpush1.xpose.msra.mxu0 0.0
    %1481 = vmatprep.subr.mxu0 0.0
    %1482 = vmatpush1.xpose.msra.mxu0 0.0
    %1483 = vmatprep.subr.mxu0 0.0
    %1484 = vmatpush1.xpose.msra.mxu0 0.0
    %1485 = vmatprep.subr.mxu0 0.0
    %1486 = vmatpush1.xpose.msra.mxu0 0.0
    %1487 = vmatprep.mubr.f32.mxu0 0.0
    %1488 = vmatmul.mubr.f32.gmra.mrb[0].mxu0 %v1412
    %v1489 = vpop.f32.mrb[0].mxu0
    %v1490 = vadd.f32 %v83, %v1489
    %v1491 = vpop.f32.mrb[0].mxu0
    %1492 = vmatprep.mubr.f32.mxu0 0.0
    %1493 = vmatmul.mubr.f32.gmra.mrb[0].mxu0 %v1415
    %v1494 = vpop.f32.mrb[0].mxu0
    %v1495 = vadd.f32 %v84, %v1494
    %v1496 = vpop.f32.mrb[0].mxu0
    %1497 = vdwg.mxu0
    %v1499 = vsel %vm344, %v650, 0
    %v1502 = vsel %vm344, %v718, 0
    %v1505 = vsel %vm344, %v946, 0
    %v1508 = vsel %vm344, %v1014, 0
    %1510 = vmatprep.subr.mxu0 0.0
    %1511 = vmatpush1.xpose.msra.mxu0 %v1505
    %1512 = vmatprep.subr.mxu0 0.0
    %1513 = vmatpush1.xpose.msra.mxu0 %v1508
    %1514 = vmatprep.subr.mxu0 0.0
    %1515 = vmatpush1.xpose.msra.mxu0 0.0
    %1516 = vmatprep.subr.mxu0 0.0
    %1517 = vmatpush1.xpose.msra.mxu0 0.0
    %1518 = vmatprep.subr.mxu0 0.0
    %1519 = vmatpush1.xpose.msra.mxu0 0.0
    %1520 = vmatprep.subr.mxu0 0.0
    %1521 = vmatpush1.xpose.msra.mxu0 0.0
    %1522 = vmatprep.subr.mxu0 0.0
    %1523 = vmatpush1.xpose.msra.mxu0 0.0
    %1524 = vmatprep.subr.mxu0 0.0
    %1525 = vmatpush1.xpose.msra.mxu0 0.0
    %1526 = vmatprep.subr.mxu0 0.0
    %1527 = vmatpush1.xpose.msra.mxu0 0.0
    %1528 = vmatprep.subr.mxu0 0.0
    %1529 = vmatpush1.xpose.msra.mxu0 0.0
    %1530 = vmatprep.subr.mxu0 0.0
    %1531 = vmatpush1.xpose.msra.mxu0 0.0
    %1532 = vmatprep.subr.mxu0 0.0
    %1533 = vmatpush1.xpose.msra.mxu0 0.0
    %1534 = vmatprep.subr.mxu0 0.0
    %1535 = vmatpush1.xpose.msra.mxu0 0.0
    %1536 = vmatprep.subr.mxu0 0.0
    %1537 = vmatpush1.xpose.msra.mxu0 0.0
    %1538 = vmatprep.subr.mxu0 0.0
    %1539 = vmatpush1.xpose.msra.mxu0 0.0
    %1540 = vmatprep.subr.mxu0 0.0
    %1541 = vmatpush1.xpose.msra.mxu0 0.0
    %1542 = vmatprep.subr.mxu0 0.0
    %1543 = vmatpush1.xpose.msra.mxu0 0.0
    %1544 = vmatprep.subr.mxu0 0.0
    %1545 = vmatpush1.xpose.msra.mxu0 0.0
    %1546 = vmatprep.subr.mxu0 0.0
    %1547 = vmatpush1.xpose.msra.mxu0 0.0
    %1548 = vmatprep.subr.mxu0 0.0
    %1549 = vmatpush1.xpose.msra.mxu0 0.0
    %1550 = vmatprep.subr.mxu0 0.0
    %1551 = vmatpush1.xpose.msra.mxu0 0.0
    %1552 = vmatprep.subr.mxu0 0.0
    %1553 = vmatpush1.xpose.msra.mxu0 0.0
    %1554 = vmatprep.subr.mxu0 0.0
    %1555 = vmatpush1.xpose.msra.mxu0 0.0
    %1556 = vmatprep.subr.mxu0 0.0
    %1557 = vmatpush1.xpose.msra.mxu0 0.0
    %1558 = vmatprep.subr.mxu0 0.0
    %1559 = vmatpush1.xpose.msra.mxu0 0.0
    %1560 = vmatprep.subr.mxu0 0.0
    %1561 = vmatpush1.xpose.msra.mxu0 0.0
    %1562 = vmatprep.subr.mxu0 0.0
    %1563 = vmatpush1.xpose.msra.mxu0 0.0
    %1564 = vmatprep.subr.mxu0 0.0
    %1565 = vmatpush1.xpose.msra.mxu0 0.0
    %1566 = vmatprep.subr.mxu0 0.0
    %1567 = vmatpush1.xpose.msra.mxu0 0.0
    %1568 = vmatprep.subr.mxu0 0.0
    %1569 = vmatpush1.xpose.msra.mxu0 0.0
    %1570 = vmatprep.subr.mxu0 0.0
    %1571 = vmatpush1.xpose.msra.mxu0 0.0
    %1572 = vmatprep.subr.mxu0 0.0
    %1573 = vmatpush1.xpose.msra.mxu0 0.0
    %1574 = vmatprep.mubr.f32.mxu0 0.0
    %1575 = vmatmul.mubr.f32.gmra.mrb[0].mxu0 %v1499
    %v1576 = vpop.f32.mrb[0].mxu0
    %v1577 = vadd.f32 %v83, %v1576
    %v1578 = vpop.f32.mrb[0].mxu0
    %1579 = vmatprep.mubr.f32.mxu0 0.0
    %1580 = vmatmul.mubr.f32.gmra.mrb[0].mxu0 %v1502
    %v1581 = vpop.f32.mrb[0].mxu0
    %v1582 = vadd.f32 %v84, %v1581
    %v1583 = vpop.f32.mrb[0].mxu0
    %1584 = vdwg.mxu0
    %v1586 = vsel %vm344, %v651, 0
    %v1589 = vsel %vm344, %v719, 0
    %v1592 = vsel %vm344, %v947, 0
    %v1595 = vsel %vm344, %v1015, 0
    %1597 = vmatprep.subr.mxu0 0.0
    %1598 = vmatpush1.xpose.msra.mxu0 %v1592
    %1599 = vmatprep.subr.mxu0 0.0
    %1600 = vmatpush1.xpose.msra.mxu0 %v1595
    %1601 = vmatprep.subr.mxu0 0.0
    %1602 = vmatpush1.xpose.msra.mxu0 0.0
    %1603 = vmatprep.subr.mxu0 0.0
    %1604 = vmatpush1.xpose.msra.mxu0 0.0
    %1605 = vmatprep.subr.mxu0 0.0
    %1606 = vmatpush1.xpose.msra.mxu0 0.0
    %1607 = vmatprep.subr.mxu0 0.0
    %1608 = vmatpush1.xpose.msra.mxu0 0.0
    %1609 = vmatprep.subr.mxu0 0.0
    %1610 = vmatpush1.xpose.msra.mxu0 0.0
    %1611 = vmatprep.subr.mxu0 0.0
    %1612 = vmatpush1.xpose.msra.mxu0 0.0
    %1613 = vmatprep.subr.mxu0 0.0
    %1614 = vmatpush1.xpose.msra.mxu0 0.0
    %1615 = vmatprep.subr.mxu0 0.0
    %1616 = vmatpush1.xpose.msra.mxu0 0.0
    %1617 = vmatprep.subr.mxu0 0.0
    %1618 = vmatpush1.xpose.msra.mxu0 0.0
    %1619 = vmatprep.subr.mxu0 0.0
    %1620 = vmatpush1.xpose.msra.mxu0 0.0
    %1621 = vmatprep.subr.mxu0 0.0
    %1622 = vmatpush1.xpose.msra.mxu0 0.0
    %1623 = vmatprep.subr.mxu0 0.0
    %1624 = vmatpush1.xpose.msra.mxu0 0.0
    %1625 = vmatprep.subr.mxu0 0.0
    %1626 = vmatpush1.xpose.msra.mxu0 0.0
    %1627 = vmatprep.subr.mxu0 0.0
    %1628 = vmatpush1.xpose.msra.mxu0 0.0
    %1629 = vmatprep.subr.mxu0 0.0
    %1630 = vmatpush1.xpose.msra.mxu0 0.0
    %1631 = vmatprep.subr.mxu0 0.0
    %1632 = vmatpush1.xpose.msra.mxu0 0.0
    %1633 = vmatprep.subr.mxu0 0.0
    %1634 = vmatpush1.xpose.msra.mxu0 0.0
    %1635 = vmatprep.subr.mxu0 0.0
    %1636 = vmatpush1.xpose.msra.mxu0 0.0
    %1637 = vmatprep.subr.mxu0 0.0
    %1638 = vmatpush1.xpose.msra.mxu0 0.0
    %1639 = vmatprep.subr.mxu0 0.0
    %1640 = vmatpush1.xpose.msra.mxu0 0.0
    %1641 = vmatprep.subr.mxu0 0.0
    %1642 = vmatpush1.xpose.msra.mxu0 0.0
    %1643 = vmatprep.subr.mxu0 0.0
    %1644 = vmatpush1.xpose.msra.mxu0 0.0
    %1645 = vmatprep.subr.mxu0 0.0
    %1646 = vmatpush1.xpose.msra.mxu0 0.0
    %1647 = vmatprep.subr.mxu0 0.0
    %1648 = vmatpush1.xpose.msra.mxu0 0.0
    %1649 = vmatprep.subr.mxu0 0.0
    %1650 = vmatpush1.xpose.msra.mxu0 0.0
    %1651 = vmatprep.subr.mxu0 0.0
    %1652 = vmatpush1.xpose.msra.mxu0 0.0
    %1653 = vmatprep.subr.mxu0 0.0
    %1654 = vmatpush1.xpose.msra.mxu0 0.0
    %1655 = vmatprep.subr.mxu0 0.0
    %1656 = vmatpush1.xpose.msra.mxu0 0.0
    %1657 = vmatprep.subr.mxu0 0.0
    %1658 = vmatpush1.xpose.msra.mxu0 0.0
    %1659 = vmatprep.subr.mxu0 0.0
    %1660 = vmatpush1.xpose.msra.mxu0 0.0
    %1661 = vmatprep.mubr.f32.mxu0 0.0
    %1662 = vmatmul.mubr.f32.gmra.mrb[0].mxu0 %v1586
    %v1663 = vpop.f32.mrb[0].mxu0
    %v1664 = vadd.f32 %v83, %v1663
    %v1665 = vpop.f32.mrb[0].mxu0
    %1666 = vmatprep.mubr.f32.mxu0 0.0
    %1667 = vmatmul.mubr.f32.gmra.mrb[0].mxu0 %v1589
    %v1668 = vpop.f32.mrb[0].mxu0
    %v1669 = vadd.f32 %v84, %v1668
    %v1670 = vpop.f32.mrb[0].mxu0
    %1671 = vdwg.mxu0
    %vm1672 = vcmask 130048
    %v1673 = vsel %vm1672, %v1403, -inf
    %1674 = vmax.xlane.f32.xlu0 %v1673
    %v1675 = vpop.xlane.xlu0 %1674
    %v1676 = vsel %vm1672, %v1408, -inf
    %1677 = vmax.xlane.f32.xlu0 %v1676
    %v1678 = vpop.xlane.xlu0 %1677
    %v1679 = vsel %vm1672, %v1490, -inf
    %1680 = vmax.xlane.f32.xlu0 %v1679
    %v1681 = vpop.xlane.xlu0 %1680
    %v1682 = vsel %vm1672, %v1495, -inf
    %1683 = vmax.xlane.f32.xlu0 %v1682
    %v1684 = vpop.xlane.xlu0 %1683
    %v1685 = vsel %vm1672, %v1577, -inf
    %1686 = vmax.xlane.f32.xlu0 %v1685
    %v1687 = vpop.xlane.xlu0 %1686
    %v1688 = vsel %vm1672, %v1582, -inf
    %1689 = vmax.xlane.f32.xlu0 %v1688
    %v1690 = vpop.xlane.xlu0 %1689
    %v1691 = vsel %vm1672, %v1664, -inf
    %1692 = vmax.xlane.f32.xlu0 %v1691
    %v1693 = vpop.xlane.xlu0 %1692
    %v1694 = vsel %vm1672, %v1669, -inf
    %1695 = vmax.xlane.f32.xlu0 %v1694
    %v1696 = vpop.xlane.xlu0 %1695
    %v1697 = vsub.f32 %v1403, %v1675
    %v1698 = vsub.f32 %v1408, %v1678
    %v1699 = vsub.f32 %v1490, %v1681
    %v1700 = vsub.f32 %v1495, %v1684
    %v1701 = vsub.f32 %v1577, %v1687
    %v1702 = vsub.f32 %v1582, %v1690
    %v1703 = vsub.f32 %v1664, %v1693
    %v1704 = vsub.f32 %v1669, %v1696
    %v1705 = vmul.f32 %v1697, 1.442695
    %v1706 = vpow.pop %v1705
    %v1707 = vmul.f32 %v1698, 1.442695
    %v1708 = vpow.pop %v1707
    %v1709 = vmul.f32 %v1699, 1.442695
    %v1710 = vpow.pop %v1709
    %v1711 = vmul.f32 %v1700, 1.442695
    %v1712 = vpow.pop %v1711
    %v1713 = vmul.f32 %v1701, 1.442695
    %v1714 = vpow.pop %v1713
    %v1715 = vmul.f32 %v1702, 1.442695
    %v1716 = vpow.pop %v1715
    %v1717 = vmul.f32 %v1703, 1.442695
    %v1718 = vpow.pop %v1717
    %v1719 = vmul.f32 %v1704, 1.442695
    %v1720 = vpow.pop %v1719
    %v1721 = vsel %vm1672, %v1706, 0.0
    %1722 = vadd.xlane.f32.xlu0 %v1721
    %v1723 = vpop.xlane.xlu0 %1722
    %v1724 = vsel %vm1672, %v1708, 0.0
    %1725 = vadd.xlane.f32.xlu0 %v1724
    %v1726 = vpop.xlane.xlu0 %1725
    %v1727 = vsel %vm1672, %v1710, 0.0
    %1728 = vadd.xlane.f32.xlu0 %v1727
    %v1729 = vpop.xlane.xlu0 %1728
    %v1730 = vsel %vm1672, %v1712, 0.0
    %1731 = vadd.xlane.f32.xlu0 %v1730
    %v1732 = vpop.xlane.xlu0 %1731
    %v1733 = vsel %vm1672, %v1714, 0.0
    %1734 = vadd.xlane.f32.xlu0 %v1733
    %v1735 = vpop.xlane.xlu0 %1734
    %v1736 = vsel %vm1672, %v1716, 0.0
    %1737 = vadd.xlane.f32.xlu0 %v1736
    %v1738 = vpop.xlane.xlu0 %1737
    %v1739 = vsel %vm1672, %v1718, 0.0
    %1740 = vadd.xlane.f32.xlu0 %v1739
    %v1741 = vpop.xlane.xlu0 %1740
    %v1742 = vsel %vm1672, %v1720, 0.0
    %1743 = vadd.xlane.f32.xlu0 %v1742
    %v1744 = vpop.xlane.xlu0 %1743
    %v1746 = vsel %vm1672, %v1706, 0
    %v1749 = vsel %vm1672, %v1708, 0
    %1751 = vmatprep.subr.mxu0 0.0
    %1752 = vmatpush1.msra.mxu0 %v1252
    %1753 = vmatprep.subr.mxu0 0.0
    %1754 = vmatpush1.msra.mxu0 %v1320
    %1755 = vmatprep.subr.mxu0 0.0
    %1756 = vmatpush1.msra.mxu0 0.0
    %1757 = vmatprep.subr.mxu0 0.0
    %1758 = vmatpush1.msra.mxu0 0.0
    %1759 = vmatprep.subr.mxu0 0.0
    %1760 = vmatpush1.msra.mxu0 0.0
    %1761 = vmatprep.subr.mxu0 0.0
    %1762 = vmatpush1.msra.mxu0 0.0
    %1763 = vmatprep.subr.mxu0 0.0
    %1764 = vmatpush1.msra.mxu0 0.0
    %1765 = vmatprep.subr.mxu0 0.0
    %1766 = vmatpush1.msra.mxu0 0.0
    %1767 = vmatprep.subr.mxu0 0.0
    %1768 = vmatpush1.msra.mxu0 0.0
    %1769 = vmatprep.subr.mxu0 0.0
    %1770 = vmatpush1.msra.mxu0 0.0
    %1771 = vmatprep.subr.mxu0 0.0
    %1772 = vmatpush1.msra.mxu0 0.0
    %1773 = vmatprep.subr.mxu0 0.0
    %1774 = vmatpush1.msra.mxu0 0.0
    %1775 = vmatprep.subr.mxu0 0.0
    %1776 = vmatpush1.msra.mxu0 0.0
    %1777 = vmatprep.subr.mxu0 0.0
    %1778 = vmatpush1.msra.mxu0 0.0
    %1779 = vmatprep.subr.mxu0 0.0
    %1780 = vmatpush1.msra.mxu0 0.0
    %1781 = vmatprep.subr.mxu0 0.0
    %1782 = vmatpush1.msra.mxu0 0.0
    %1783 = vmatprep.subr.mxu0 0.0
    %1784 = vmatpush1.msra.mxu0 0.0
    %1785 = vmatprep.subr.mxu0 0.0
    %1786 = vmatpush1.msra.mxu0 0.0
    %1787 = vmatprep.subr.mxu0 0.0
    %1788 = vmatpush1.msra.mxu0 0.0
    %1789 = vmatprep.subr.mxu0 0.0
    %1790 = vmatpush1.msra.mxu0 0.0
    %1791 = vmatprep.subr.mxu0 0.0
    %1792 = vmatpush1.msra.mxu0 0.0
    %1793 = vmatprep.subr.mxu0 0.0
    %1794 = vmatpush1.msra.mxu0 0.0
    %1795 = vmatprep.subr.mxu0 0.0
    %1796 = vmatpush1.msra.mxu0 0.0
    %1797 = vmatprep.subr.mxu0 0.0
    %1798 = vmatpush1.msra.mxu0 0.0
    %1799 = vmatprep.subr.mxu0 0.0
    %1800 = vmatpush1.msra.mxu0 0.0
    %1801 = vmatprep.subr.mxu0 0.0
    %1802 = vmatpush1.msra.mxu0 0.0
    %1803 = vmatprep.subr.mxu0 0.0
    %1804 = vmatpush1.msra.mxu0 0.0
    %1805 = vmatprep.subr.mxu0 0.0
    %1806 = vmatpush1.msra.mxu0 0.0
    %1807 = vmatprep.subr.mxu0 0.0
    %1808 = vmatpush1.msra.mxu0 0.0
    %1809 = vmatprep.subr.mxu0 0.0
    %1810 = vmatpush1.msra.mxu0 0.0
    %1811 = vmatprep.subr.mxu0 0.0
    %1812 = vmatpush1.msra.mxu0 0.0
    %1813 = vmatprep.subr.mxu0 0.0
    %1814 = vmatpush1.msra.mxu0 0.0
    %1815 = vmatprep.mubr.f32.mxu0 0.0
    %1816 = vmatmul.mubr.f32.gmra.mrb[0].mxu0 %v1746
    %v1817 = vpop.f32.mrb[0].mxu0
    %v1818 = vadd.f32 0.0, %v1817
    %v1819 = vpop.f32.mrb[0].mxu0
    %1820 = vmatprep.mubr.f32.mxu0 0.0
    %1821 = vmatmul.mubr.f32.gmra.mrb[0].mxu0 %v1749
    %v1822 = vpop.f32.mrb[0].mxu0
    %v1823 = vadd.f32 0.0, %v1822
    %v1824 = vpop.f32.mrb[0].mxu0
    %1825 = vdwg.mxu0
    %v1827 = vsel %vm1672, %v1710, 0
    %v1830 = vsel %vm1672, %v1712, 0
    %1832 = vmatprep.subr.mxu0 0.0
    %1833 = vmatpush1.msra.mxu0 %v1253
    %1834 = vmatprep.subr.mxu0 0.0
    %1835 = vmatpush1.msra.mxu0 %v1321
    %1836 = vmatprep.subr.mxu0 0.0
    %1837 = vmatpush1.msra.mxu0 0.0
    %1838 = vmatprep.subr.mxu0 0.0
    %1839 = vmatpush1.msra.mxu0 0.0
    %1840 = vmatprep.subr.mxu0 0.0
    %1841 = vmatpush1.msra.mxu0 0.0
    %1842 = vmatprep.subr.mxu0 0.0
    %1843 = vmatpush1.msra.mxu0 0.0
    %1844 = vmatprep.subr.mxu0 0.0
    %1845 = vmatpush1.msra.mxu0 0.0
    %1846 = vmatprep.subr.mxu0 0.0
    %1847 = vmatpush1.msra.mxu0 0.0
    %1848 = vmatprep.subr.mxu0 0.0
    %1849 = vmatpush1.msra.mxu0 0.0
    %1850 = vmatprep.subr.mxu0 0.0
    %1851 = vmatpush1.msra.mxu0 0.0
    %1852 = vmatprep.subr.mxu0 0.0
    %1853 = vmatpush1.msra.mxu0 0.0
    %1854 = vmatprep.subr.mxu0 0.0
    %1855 = vmatpush1.msra.mxu0 0.0
    %1856 = vmatprep.subr.mxu0 0.0
    %1857 = vmatpush1.msra.mxu0 0.0
    %1858 = vmatprep.subr.mxu0 0.0
    %1859 = vmatpush1.msra.mxu0 0.0
    %1860 = vmatprep.subr.mxu0 0.0
    %1861 = vmatpush1.msra.mxu0 0.0
    %1862 = vmatprep.subr.mxu0 0.0
    %1863 = vmatpush1.msra.mxu0 0.0
    %1864 = vmatprep.subr.mxu0 0.0
    %1865 = vmatpush1.msra.mxu0 0.0
    %1866 = vmatprep.subr.mxu0 0.0
    %1867 = vmatpush1.msra.mxu0 0.0
    %1868 = vmatprep.subr.mxu0 0.0
    %1869 = vmatpush1.msra.mxu0 0.0
    %1870 = vmatprep.subr.mxu0 0.0
    %1871 = vmatpush1.msra.mxu0 0.0
    %1872 = vmatprep.subr.mxu0 0.0
    %1873 = vmatpush1.msra.mxu0 0.0
    %1874 = vmatprep.subr.mxu0 0.0
    %1875 = vmatpush1.msra.mxu0 0.0
    %1876 = vmatprep.subr.mxu0 0.0
    %1877 = vmatpush1.msra.mxu0 0.0
    %1878 = vmatprep.subr.mxu0 0.0
    %1879 = vmatpush1.msra.mxu0 0.0
    %1880 = vmatprep.subr.mxu0 0.0
    %1881 = vmatpush1.msra.mxu0 0.0
    %1882 = vmatprep.subr.mxu0 0.0
    %1883 = vmatpush1.msra.mxu0 0.0
    %1884 = vmatprep.subr.mxu0 0.0
    %1885 = vmatpush1.msra.mxu0 0.0
    %1886 = vmatprep.subr.mxu0 0.0
    %1887 = vmatpush1.msra.mxu0 0.0
    %1888 = vmatprep.subr.mxu0 0.0
    %1889 = vmatpush1.msra.mxu0 0.0
    %1890 = vmatprep.subr.mxu0 0.0
    %1891 = vmatpush1.msra.mxu0 0.0
    %1892 = vmatprep.subr.mxu0 0.0
    %1893 = vmatpush1.msra.mxu0 0.0
    %1894 = vmatprep.subr.mxu0 0.0
    %1895 = vmatpush1.msra.mxu0 0.0
    %1896 = vmatprep.mubr.f32.mxu0 0.0
    %1897 = vmatmul.mubr.f32.gmra.mrb[0].mxu0 %v1827
    %v1898 = vpop.f32.mrb[0].mxu0
    %v1899 = vadd.f32 0.0, %v1898
    %v1900 = vpop.f32.mrb[0].mxu0
    %1901 = vmatprep.mubr.f32.mxu0 0.0
    %1902 = vmatmul.mubr.f32.gmra.mrb[0].mxu0 %v1830
    %v1903 = vpop.f32.mrb[0].mxu0
    %v1904 = vadd.f32 0.0, %v1903
    %v1905 = vpop.f32.mrb[0].mxu0
    %1906 = vdwg.mxu0
    %v1908 = vsel %vm1672, %v1714, 0
    %v1911 = vsel %vm1672, %v1716, 0
    %1913 = vmatprep.subr.mxu0 0.0
    %1914 = vmatpush1.msra.mxu0 %v1254
    %1915 = vmatprep.subr.mxu0 0.0
    %1916 = vmatpush1.msra.mxu0 %v1322
    %1917 = vmatprep.subr.mxu0 0.0
    %1918 = vmatpush1.msra.mxu0 0.0
    %1919 = vmatprep.subr.mxu0 0.0
    %1920 = vmatpush1.msra.mxu0 0.0
    %1921 = vmatprep.subr.mxu0 0.0
    %1922 = vmatpush1.msra.mxu0 0.0
    %1923 = vmatprep.subr.mxu0 0.0
    %1924 = vmatpush1.msra.mxu0 0.0
    %1925 = vmatprep.subr.mxu0 0.0
    %1926 = vmatpush1.msra.mxu0 0.0
    %1927 = vmatprep.subr.mxu0 0.0
    %1928 = vmatpush1.msra.mxu0 0.0
    %1929 = vmatprep.subr.mxu0 0.0
    %1930 = vmatpush1.msra.mxu0 0.0
    %1931 = vmatprep.subr.mxu0 0.0
    %1932 = vmatpush1.msra.mxu0 0.0
    %1933 = vmatprep.subr.mxu0 0.0
    %1934 = vmatpush1.msra.mxu0 0.0
    %1935 = vmatprep.subr.mxu0 0.0
    %1936 = vmatpush1.msra.mxu0 0.0
    %1937 = vmatprep.subr.mxu0 0.0
    %1938 = vmatpush1.msra.mxu0 0.0
    %1939 = vmatprep.subr.mxu0 0.0
    %1940 = vmatpush1.msra.mxu0 0.0
    %1941 = vmatprep.subr.mxu0 0.0
    %1942 = vmatpush1.msra.mxu0 0.0
    %1943 = vmatprep.subr.mxu0 0.0
    %1944 = vmatpush1.msra.mxu0 0.0
    %1945 = vmatprep.subr.mxu0 0.0
    %1946 = vmatpush1.msra.mxu0 0.0
    %1947 = vmatprep.subr.mxu0 0.0
    %1948 = vmatpush1.msra.mxu0 0.0
    %1949 = vmatprep.subr.mxu0 0.0
    %1950 = vmatpush1.msra.mxu0 0.0
    %1951 = vmatprep.subr.mxu0 0.0
    %1952 = vmatpush1.msra.mxu0 0.0
    %1953 = vmatprep.subr.mxu0 0.0
    %1954 = vmatpush1.msra.mxu0 0.0
    %1955 = vmatprep.subr.mxu0 0.0
    %1956 = vmatpush1.msra.mxu0 0.0
    %1957 = vmatprep.subr.mxu0 0.0
    %1958 = vmatpush1.msra.mxu0 0.0
    %1959 = vmatprep.subr.mxu0 0.0
    %1960 = vmatpush1.msra.mxu0 0.0
    %1961 = vmatprep.subr.mxu0 0.0
    %1962 = vmatpush1.msra.mxu0 0.0
    %1963 = vmatprep.subr.mxu0 0.0
    %1964 = vmatpush1.msra.mxu0 0.0
    %1965 = vmatprep.subr.mxu0 0.0
    %1966 = vmatpush1.msra.mxu0 0.0
    %1967 = vmatprep.subr.mxu0 0.0
    %1968 = vmatpush1.msra.mxu0 0.0
    %1969 = vmatprep.subr.mxu0 0.0
    %1970 = vmatpush1.msra.mxu0 0.0
    %1971 = vmatprep.subr.mxu0 0.0
    %1972 = vmatpush1.msra.mxu0 0.0
    %1973 = vmatprep.subr.mxu0 0.0
    %1974 = vmatpush1.msra.mxu0 0.0
    %1975 = vmatprep.subr.mxu0 0.0
    %1976 = vmatpush1.msra.mxu0 0.0
    %1977 = vmatprep.mubr.f32.mxu0 0.0
    %1978 = vmatmul.mubr.f32.gmra.mrb[0].mxu0 %v1908
    %v1979 = vpop.f32.mrb[0].mxu0
    %v1980 = vadd.f32 0.0, %v1979
    %v1981 = vpop.f32.mrb[0].mxu0
    %1982 = vmatprep.mubr.f32.mxu0 0.0
    %1983 = vmatmul.mubr.f32.gmra.mrb[0].mxu0 %v1911
    %v1984 = vpop.f32.mrb[0].mxu0
    %v1985 = vadd.f32 0.0, %v1984
    %v1986 = vpop.f32.mrb[0].mxu0
    %1987 = vdwg.mxu0
    %v1989 = vsel %vm1672, %v1718, 0
    %v1992 = vsel %vm1672, %v1720, 0
    %1994 = vmatprep.subr.mxu0 0.0
    %1995 = vmatpush1.msra.mxu0 %v1255
    %1996 = vmatprep.subr.mxu0 0.0
    %1997 = vmatpush1.msra.mxu0 %v1323
    %1998 = vmatprep.subr.mxu0 0.0
    %1999 = vmatpush1.msra.mxu0 0.0
    %2000 = vmatprep.subr.mxu0 0.0
    %2001 = vmatpush1.msra.mxu0 0.0
    %2002 = vmatprep.subr.mxu0 0.0
    %2003 = vmatpush1.msra.mxu0 0.0
    %2004 = vmatprep.subr.mxu0 0.0
    %2005 = vmatpush1.msra.mxu0 0.0
    %2006 = vmatprep.subr.mxu0 0.0
    %2007 = vmatpush1.msra.mxu0 0.0
    %2008 = vmatprep.subr.mxu0 0.0
    %2009 = vmatpush1.msra.mxu0 0.0
    %2010 = vmatprep.subr.mxu0 0.0
    %2011 = vmatpush1.msra.mxu0 0.0
    %2012 = vmatprep.subr.mxu0 0.0
    %2013 = vmatpush1.msra.mxu0 0.0
    %2014 = vmatprep.subr.mxu0 0.0
    %2015 = vmatpush1.msra.mxu0 0.0
    %2016 = vmatprep.subr.mxu0 0.0
    %2017 = vmatpush1.msra.mxu0 0.0
    %2018 = vmatprep.subr.mxu0 0.0
    %2019 = vmatpush1.msra.mxu0 0.0
    %2020 = vmatprep.subr.mxu0 0.0
    %2021 = vmatpush1.msra.mxu0 0.0
    %2022 = vmatprep.subr.mxu0 0.0
    %2023 = vmatpush1.msra.mxu0 0.0
    %2024 = vmatprep.subr.mxu0 0.0
    %2025 = vmatpush1.msra.mxu0 0.0
    %2026 = vmatprep.subr.mxu0 0.0
    %2027 = vmatpush1.msra.mxu0 0.0
    %2028 = vmatprep.subr.mxu0 0.0
    %2029 = vmatpush1.msra.mxu0 0.0
    %2030 = vmatprep.subr.mxu0 0.0
    %2031 = vmatpush1.msra.mxu0 0.0
    %2032 = vmatprep.subr.mxu0 0.0
    %2033 = vmatpush1.msra.mxu0 0.0
    %2034 = vmatprep.subr.mxu0 0.0
    %2035 = vmatpush1.msra.mxu0 0.0
    %2036 = vmatprep.subr.mxu0 0.0
    %2037 = vmatpush1.msra.mxu0 0.0
    %2038 = vmatprep.subr.mxu0 0.0
    %2039 = vmatpush1.msra.mxu0 0.0
    %2040 = vmatprep.subr.mxu0 0.0
    %2041 = vmatpush1.msra.mxu0 0.0
    %2042 = vmatprep.subr.mxu0 0.0
    %2043 = vmatpush1.msra.mxu0 0.0
    %2044 = vmatprep.subr.mxu0 0.0
    %2045 = vmatpush1.msra.mxu0 0.0
    %2046 = vmatprep.subr.mxu0 0.0
    %2047 = vmatpush1.msra.mxu0 0.0
    %2048 = vmatprep.subr.mxu0 0.0
    %2049 = vmatpush1.msra.mxu0 0.0
    %2050 = vmatprep.subr.mxu0 0.0
    %2051 = vmatpush1.msra.mxu0 0.0
    %2052 = vmatprep.subr.mxu0 0.0
    %2053 = vmatpush1.msra.mxu0 0.0
    %2054 = vmatprep.subr.mxu0 0.0
    %2055 = vmatpush1.msra.mxu0 0.0
    %2056 = vmatprep.subr.mxu0 0.0
    %2057 = vmatpush1.msra.mxu0 0.0
    %2058 = vmatprep.mubr.f32.mxu0 0.0
    %2059 = vmatmul.mubr.f32.gmra.mrb[0].mxu0 %v1989
    %v2060 = vpop.f32.mrb[0].mxu0
    %v2061 = vadd.f32 0.0, %v2060
    %v2062 = vpop.f32.mrb[0].mxu0
    %2063 = vmatprep.mubr.f32.mxu0 0.0
    %2064 = vmatmul.mubr.f32.gmra.mrb[0].mxu0 %v1992
    %v2065 = vpop.f32.mrb[0].mxu0
    %v2066 = vadd.f32 0.0, %v2065
    %v2067 = vpop.f32.mrb[0].mxu0
    %2068 = vdwg.mxu0
    %v2069 = vrcp.pop %v1723
    %v2070 = vrcp.pop %v1726
    %v2071 = vrcp.pop %v1729
    %v2072 = vrcp.pop %v1732
    %v2073 = vrcp.pop %v1735
    %v2074 = vrcp.pop %v1738
    %v2075 = vrcp.pop %v1741
    %v2076 = vrcp.pop %v1744
    %v2077 = vmul.f32 %v1818, %v2069
    %v2078 = vmul.f32 %v1823, %v2070
    %v2079 = vmul.f32 %v1899, %v2071
    %v2080 = vmul.f32 %v1904, %v2072
    %v2081 = vmul.f32 %v1980, %v2073
    %v2082 = vmul.f32 %v1985, %v2074
    %v2083 = vmul.f32 %v2061, %v2075
    %v2084 = vmul.f32 %v2066, %v2076
    %v2085 = vcombine.low %v2077, %v2081
    %v2086 = vcombine.high %v2077, %v2081
    %v2088 = vunpack.c.l.s4 1983009808
    %v2089 = vunpack.c.0.s8 %v2088
    %v2090 = vlaneseq
    %v2091 = vshrl.u32 %v2090, 7
    %v2092 = vsub.s32 %v2089, %v2091
    %v2093 = vrot.slane %v2085, %v2092
    %v2095 = vunpack.c.l.s4 1983009808
    %v2096 = vunpack.c.0.s8 %v2095
    %v2097 = vlaneseq
    %v2098 = vshrl.u32 %v2097, 7
    %v2099 = vsub.s32 %v2096, %v2098
    %v2100 = vrot.slane %v2086, %v2099
    %v2101 = vcombine.low %v2079, %v2083
    %v2102 = vcombine.high %v2079, %v2083
    %v2104 = vunpack.c.l.s4 1983009808
    %v2105 = vunpack.c.0.s8 %v2104
    %v2106 = vlaneseq
    %v2107 = vshrl.u32 %v2106, 7
    %v2108 = vsub.s32 %v2105, %v2107
    %v2109 = vrot.slane %v2101, %v2108
    %v2111 = vunpack.c.l.s4 1983009808
    %v2112 = vunpack.c.0.s8 %v2111
    %v2113 = vlaneseq
    %v2114 = vshrl.u32 %v2113, 7
    %v2115 = vsub.s32 %v2112, %v2114
    %v2116 = vrot.slane %v2102, %v2115
    %v2117 = vcombine.low %v2093, %v2109
    %v2118 = vcombine.high %v2093, %v2109
    %v2120 = vunpack.c.l.s4 1934713408
    %v2121 = vunpack.c.0.s8 %v2120
    %v2122 = vlaneseq
    %v2123 = vshrl.u32 %v2122, 7
    %v2124 = vsub.s32 %v2121, %v2123
    %v2125 = vrot.slane %v2117, %v2124
    %v2127 = vunpack.c.l.s4 1934713408
    %v2128 = vunpack.c.0.s8 %v2127
    %v2129 = vlaneseq
    %v2130 = vshrl.u32 %v2129, 7
    %v2131 = vsub.s32 %v2128, %v2130
    %v2132 = vrot.slane %v2118, %v2131
    %v2133 = vcombine.low %v2100, %v2116
    %v2134 = vcombine.high %v2100, %v2116
    %v2136 = vunpack.c.l.s4 1934713408
    %v2137 = vunpack.c.0.s8 %v2136
    %v2138 = vlaneseq
    %v2139 = vshrl.u32 %v2138, 7
    %v2140 = vsub.s32 %v2137, %v2139
    %v2141 = vrot.slane %v2133, %v2140
    %v2143 = vunpack.c.l.s4 1934713408
    %v2144 = vunpack.c.0.s8 %v2143
    %v2145 = vlaneseq
    %v2146 = vshrl.u32 %v2145, 7
    %v2147 = vsub.s32 %v2144, %v2146
    %v2148 = vrot.slane %v2134, %v2147
    %v2149 = vcombine.high %v2125, 0.0
    %v2150 = vcombine.high %v2132, 0.0
    %v2151 = vcombine.high %v2141, 0.0
    %v2152 = vcombine.high %v2148, 0.0
    %v2153 = vcombine.low %v2078, %v2082
    %v2154 = vcombine.high %v2078, %v2082
    %v2156 = vunpack.c.l.s4 1983009808
    %v2157 = vunpack.c.0.s8 %v2156
    %v2158 = vlaneseq
    %v2159 = vshrl.u32 %v2158, 7
    %v2160 = vsub.s32 %v2157, %v2159
    %v2161 = vrot.slane %v2153, %v2160
    %v2163 = vunpack.c.l.s4 1983009808
    %v2164 = vunpack.c.0.s8 %v2163
    %v2165 = vlaneseq
    %v2166 = vshrl.u32 %v2165, 7
    %v2167 = vsub.s32 %v2164, %v2166
    %v2168 = vrot.slane %v2154, %v2167
    %v2169 = vcombine.low %v2080, %v2084
    %v2170 = vcombine.high %v2080, %v2084
    %v2172 = vunpack.c.l.s4 1983009808
    %v2173 = vunpack.c.0.s8 %v2172
    %v2174 = vlaneseq
    %v2175 = vshrl.u32 %v2174, 7
    %v2176 = vsub.s32 %v2173, %v2175
    %v2177 = vrot.slane %v2169, %v2176
    %v2179 = vunpack.c.l.s4 1983009808
    %v2180 = vunpack.c.0.s8 %v2179
    %v2181 = vlaneseq
    %v2182 = vshrl.u32 %v2181, 7
    %v2183 = vsub.s32 %v2180, %v2182
    %v2184 = vrot.slane %v2170, %v2183
    %v2185 = vcombine.low %v2161, %v2177
    %v2186 = vcombine.high %v2161, %v2177
    %v2188 = vunpack.c.l.s4 1934713408
    %v2189 = vunpack.c.0.s8 %v2188
    %v2190 = vlaneseq
    %v2191 = vshrl.u32 %v2190, 7
    %v2192 = vsub.s32 %v2189, %v2191
    %v2193 = vrot.slane %v2185, %v2192
    %v2195 = vunpack.c.l.s4 1934713408
    %v2196 = vunpack.c.0.s8 %v2195
    %v2197 = vlaneseq
    %v2198 = vshrl.u32 %v2197, 7
    %v2199 = vsub.s32 %v2196, %v2198
    %v2200 = vrot.slane %v2186, %v2199
    %v2201 = vcombine.low %v2168, %v2184
    %v2202 = vcombine.high %v2168, %v2184
    %v2204 = vunpack.c.l.s4 1934713408
    %v2205 = vunpack.c.0.s8 %v2204
    %v2206 = vlaneseq
    %v2207 = vshrl.u32 %v2206, 7
    %v2208 = vsub.s32 %v2205, %v2207
    %v2209 = vrot.slane %v2201, %v2208
    %v2211 = vunpack.c.l.s4 1934713408
    %v2212 = vunpack.c.0.s8 %v2211
    %v2213 = vlaneseq
    %v2214 = vshrl.u32 %v2213, 7
    %v2215 = vsub.s32 %v2212, %v2214
    %v2216 = vrot.slane %v2202, %v2215
    %v2217 = vcombine.high %v2193, 0.0
    %v2218 = vcombine.high %v2200, 0.0
    %v2219 = vcombine.high %v2209, 0.0
    %v2220 = vcombine.high %v2216, 0.0
    %v2221 = vcombine.low %v2125, %v2132
    %v2223 = vunpack.c.l.s4 1983009808
    %v2224 = vunpack.c.0.s8 %v2223
    %v2225 = vlaneseq
    %v2226 = vshrl.u32 %v2225, 7
    %v2227 = vsub.s32 %v2224, %v2226
    %v2228 = vrot.slane %v2221, %v2227
    %v2229 = vcombine.low %v2149, %v2150
    %v2231 = vunpack.c.l.s4 1983009808
    %v2232 = vunpack.c.0.s8 %v2231
    %v2233 = vlaneseq
    %v2234 = vshrl.u32 %v2233, 7
    %v2235 = vsub.s32 %v2232, %v2234
    %v2236 = vrot.slane %v2229, %v2235
    %v2237 = vcombine.low %v2141, %v2148
    %v2239 = vunpack.c.l.s4 1983009808
    %v2240 = vunpack.c.0.s8 %v2239
    %v2241 = vlaneseq
    %v2242 = vshrl.u32 %v2241, 7
    %v2243 = vsub.s32 %v2240, %v2242
    %v2244 = vrot.slane %v2237, %v2243
    %v2245 = vcombine.low %v2151, %v2152
    %v2247 = vunpack.c.l.s4 1983009808
    %v2248 = vunpack.c.0.s8 %v2247
    %v2249 = vlaneseq
    %v2250 = vshrl.u32 %v2249, 7
    %v2251 = vsub.s32 %v2248, %v2250
    %v2252 = vrot.slane %v2245, %v2251
    %v2253 = vcombine.low %v2228, %v2236
    %v2254 = vcombine.high %v2228, %v2236
    %v2256 = vunpack.c.l.s4 1934713408
    %v2257 = vunpack.c.0.s8 %v2256
    %v2258 = vlaneseq
    %v2259 = vshrl.u32 %v2258, 7
    %v2260 = vsub.s32 %v2257, %v2259
    %v2261 = vrot.slane %v2253, %v2260
    %v2263 = vunpack.c.l.s4 1934713408
    %v2264 = vunpack.c.0.s8 %v2263
    %v2265 = vlaneseq
    %v2266 = vshrl.u32 %v2265, 7
    %v2267 = vsub.s32 %v2264, %v2266
    %v2268 = vrot.slane %v2254, %v2267
    %v2269 = vcombine.low %v2244, %v2252
    %v2270 = vcombine.high %v2244, %v2252
    %v2272 = vunpack.c.l.s4 1934713408
    %v2273 = vunpack.c.0.s8 %v2272
    %v2274 = vlaneseq
    %v2275 = vshrl.u32 %v2274, 7
    %v2276 = vsub.s32 %v2273, %v2275
    %v2277 = vrot.slane %v2269, %v2276
    %v2279 = vunpack.c.l.s4 1934713408
    %v2280 = vunpack.c.0.s8 %v2279
    %v2281 = vlaneseq
    %v2282 = vshrl.u32 %v2281, 7
    %v2283 = vsub.s32 %v2280, %v2282
    %v2284 = vrot.slane %v2270, %v2283
    %v2285 = vcombine.low %v2261, %v2277
    %v2286 = vcombine.high %v2261, %v2277
    %v2287 = vcombine.low %v2268, %v2284
    %v2288 = vcombine.high %v2268, %v2284
    %v2289 = vcombine.low %v2193, %v2200
    %v2291 = vunpack.c.l.s4 1983009808
    %v2292 = vunpack.c.0.s8 %v2291
    %v2293 = vlaneseq
    %v2294 = vshrl.u32 %v2293, 7
    %v2295 = vsub.s32 %v2292, %v2294
    %v2296 = vrot.slane %v2289, %v2295
    %v2297 = vcombine.low %v2217, %v2218
    %v2299 = vunpack.c.l.s4 1983009808
    %v2300 = vunpack.c.0.s8 %v2299
    %v2301 = vlaneseq
    %v2302 = vshrl.u32 %v2301, 7
    %v2303 = vsub.s32 %v2300, %v2302
    %v2304 = vrot.slane %v2297, %v2303
    %v2305 = vcombine.low %v2209, %v2216
    %v2307 = vunpack.c.l.s4 1983009808
    %v2308 = vunpack.c.0.s8 %v2307
    %v2309 = vlaneseq
    %v2310 = vshrl.u32 %v2309, 7
    %v2311 = vsub.s32 %v2308, %v2310
    %v2312 = vrot.slane %v2305, %v2311
    %v2313 = vcombine.low %v2219, %v2220
    %v2315 = vunpack.c.l.s4 1983009808
    %v2316 = vunpack.c.0.s8 %v2315
    %v2317 = vlaneseq
    %v2318 = vshrl.u32 %v2317, 7
    %v2319 = vsub.s32 %v2316, %v2318
    %v2320 = vrot.slane %v2313, %v2319
    %v2321 = vcombine.low %v2296, %v2304
    %v2322 = vcombine.high %v2296, %v2304
    %v2324 = vunpack.c.l.s4 1934713408
    %v2325 = vunpack.c.0.s8 %v2324
    %v2326 = vlaneseq
    %v2327 = vshrl.u32 %v2326, 7
    %v2328 = vsub.s32 %v2325, %v2327
    %v2329 = vrot.slane %v2321, %v2328
    %v2331 = vunpack.c.l.s4 1934713408
    %v2332 = vunpack.c.0.s8 %v2331
    %v2333 = vlaneseq
    %v2334 = vshrl.u32 %v2333, 7
    %v2335 = vsub.s32 %v2332, %v2334
    %v2336 = vrot.slane %v2322, %v2335
    %v2337 = vcombine.low %v2312, %v2320
    %v2338 = vcombine.high %v2312, %v2320
    %v2340 = vunpack.c.l.s4 1934713408
    %v2341 = vunpack.c.0.s8 %v2340
    %v2342 = vlaneseq
    %v2343 = vshrl.u32 %v2342, 7
    %v2344 = vsub.s32 %v2341, %v2343
    %v2345 = vrot.slane %v2337, %v2344
    %v2347 = vunpack.c.l.s4 1934713408
    %v2348 = vunpack.c.0.s8 %v2347
    %v2349 = vlaneseq
    %v2350 = vshrl.u32 %v2349, 7
    %v2351 = vsub.s32 %v2348, %v2350
    %v2352 = vrot.slane %v2338, %v2351
    %v2353 = vcombine.low %v2329, %v2345
    %v2354 = vcombine.high %v2329, %v2345
    %v2355 = vcombine.low %v2336, %v2352
    %v2356 = vcombine.high %v2336, %v2352
    %2359 = vrot.lane.b32.xlu0 %v2286, 8
    %v2360 = vpop.permute.xlu0 %2359
    %2361 = vrot.lane.b32.xlu0 %v2354, 8
    %v2362 = vpop.permute.xlu0 %2361
    %2367 = vrot.lane.b32.xlu0 %v2287, 16
    %v2368 = vpop.permute.xlu0 %2367
    %2369 = vrot.lane.b32.xlu0 %v2355, 16
    %v2370 = vpop.permute.xlu0 %2369
    %2375 = vrot.lane.b32.xlu0 %v2288, 24
    %v2376 = vpop.permute.xlu0 %2375
    %2377 = vrot.lane.b32.xlu0 %v2356, 24
    %v2378 = vpop.permute.xlu0 %2377
    %v2381 = vsel %vm344, %v2285, %v2360
    %v2382 = vsel %vm344, %v2353, %v2362
    %v2383 = vsel %vm1672, %v2381, %v2368
    %v2384 = vsel %vm1672, %v2382, %v2370
    %vm2385 = vcmask 195584
    %v2386 = vsel %vm2385, %v2383, %v2376
    %v2387 = vsel %vm2385, %v2384, %v2378
    %v2389 = vsel %vm87, %v2386, 0
    %v2392 = vsel %vm87, %v2387, 0
    %2394 = vmatprep.subr.mxu0 0.0
    %2395 = vmatpush1.msra.mxu0 %v79
    %2396 = vmatprep.subr.mxu0 0.0
    %2397 = vmatpush1.msra.mxu0 %v80
    %2398 = vmatprep.subr.mxu0 0.0
    %2399 = vmatpush1.msra.mxu0 %v81
    %2400 = vmatprep.subr.mxu0 0.0
    %2401 = vmatpush1.msra.mxu0 %v82
    %2402 = vmatprep.subr.mxu0 0.0
    %2403 = vmatpush1.msra.mxu0 0.0
    %2404 = vmatprep.subr.mxu0 0.0
    %2405 = vmatpush1.msra.mxu0 0.0
    %2406 = vmatprep.subr.mxu0 0.0
    %2407 = vmatpush1.msra.mxu0 0.0
    %2408 = vmatprep.subr.mxu0 0.0
    %2409 = vmatpush1.msra.mxu0 0.0
    %2410 = vmatprep.subr.mxu0 0.0
    %2411 = vmatpush1.msra.mxu0 0.0
    %2412 = vmatprep.subr.mxu0 0.0
    %2413 = vmatpush1.msra.mxu0 0.0
    %2414 = vmatprep.subr.mxu0 0.0
    %2415 = vmatpush1.msra.mxu0 0.0
    %2416 = vmatprep.subr.mxu0 0.0
    %2417 = vmatpush1.msra.mxu0 0.0
    %2418 = vmatprep.subr.mxu0 0.0
    %2419 = vmatpush1.msra.mxu0 0.0
    %2420 = vmatprep.subr.mxu0 0.0
    %2421 = vmatpush1.msra.mxu0 0.0
    %2422 = vmatprep.subr.mxu0 0.0
    %2423 = vmatpush1.msra.mxu0 0.0
    %2424 = vmatprep.subr.mxu0 0.0
    %2425 = vmatpush1.msra.mxu0 0.0
    %2426 = vmatprep.subr.mxu0 0.0
    %2427 = vmatpush1.msra.mxu0 0.0
    %2428 = vmatprep.subr.mxu0 0.0
    %2429 = vmatpush1.msra.mxu0 0.0
    %2430 = vmatprep.subr.mxu0 0.0
    %2431 = vmatpush1.msra.mxu0 0.0
    %2432 = vmatprep.subr.mxu0 0.0
    %2433 = vmatpush1.msra.mxu0 0.0
    %2434 = vmatprep.subr.mxu0 0.0
    %2435 = vmatpush1.msra.mxu0 0.0
    %2436 = vmatprep.subr.mxu0 0.0
    %2437 = vmatpush1.msra.mxu0 0.0
    %2438 = vmatprep.subr.mxu0 0.0
    %2439 = vmatpush1.msra.mxu0 0.0
    %2440 = vmatprep.subr.mxu0 0.0
    %2441 = vmatpush1.msra.mxu0 0.0
    %2442 = vmatprep.subr.mxu0 0.0
    %2443 = vmatpush1.msra.mxu0 0.0
    %2444 = vmatprep.subr.mxu0 0.0
    %2445 = vmatpush1.msra.mxu0 0.0
    %2446 = vmatprep.subr.mxu0 0.0
    %2447 = vmatpush1.msra.mxu0 0.0
    %2448 = vmatprep.subr.mxu0 0.0
    %2449 = vmatpush1.msra.mxu0 0.0
    %2450 = vmatprep.subr.mxu0 0.0
    %2451 = vmatpush1.msra.mxu0 0.0
    %2452 = vmatprep.subr.mxu0 0.0
    %2453 = vmatpush1.msra.mxu0 0.0
    %2454 = vmatprep.subr.mxu0 0.0
    %2455 = vmatpush1.msra.mxu0 0.0
    %2456 = vmatprep.subr.mxu0 0.0
    %2457 = vmatpush1.msra.mxu0 0.0
    %2458 = vmatprep.mubr.f32.mxu0 0.0
    %2459 = vmatmul.mubr.f32.gmra.mrb[0].mxu0 %v2389
    %v2460 = vpop.f32.mrb[0].mxu0
    %v2461 = vadd.f32 0.0, %v2460
    %v2462 = vpop.f32.mrb[0].mxu0
    %2463 = vmatprep.mubr.f32.mxu0 0.0
    %2464 = vmatmul.mubr.f32.gmra.mrb[0].mxu0 %v2392
    %v2465 = vpop.f32.mrb[0].mxu0
    %v2466 = vadd.f32 0.0, %v2465
    %v2467 = vpop.f32.mrb[0].mxu0
    %2468 = vdwg.mxu0
    %v2469 = vmul.f32 %v2461, %v2461
    %v2470 = vmul.f32 %v2466, %v2466
    %v2471 = vsel %vm87, %v2469, 0.0
    %2472 = vadd.xlane.f32.xlu0 %v2471
    %v2473 = vpop.xlane.xlu0 %2472
    %v2474 = vsel %vm87, %v2470, 0.0
    %2475 = vadd.xlane.f32.xlu0 %v2474
    %v2476 = vpop.xlane.xlu0 %2475
    %v2477 = vmax.f32 %v2473, 1e-12
    %v2478 = vmax.f32 %v2476, 1e-12
    %v2479 = vrsqrt.pop %v2477
    %v2480 = vrsqrt.pop %v2478
    %v2481 = vmul.f32 %v2461, %v2479
    %v2482 = vmul.f32 %v2466, %v2480
    %v2483 = vsub.f32 %v2481, %v40
    %v2484 = vsub.f32 %v2482, %v41
    %v2485 = vlaneseq
    %v2486 = vshrl.u32 %v2485, 7
    %v2487 = vsub.s32 0, %v2486
    %v2488 = vrot.slane %v85, %v2487
    %v2489 = vmul.f32 %v2488, %v2483
    %v2490 = vmul.f32 %v2488, %v2484
    %v2491 = vadd.f32 %v40, %v2489
    %v2492 = vadd.f32 %v41, %v2490
    %v2493 = vmul.f32 %v2491, %v2491
    %v2494 = vmul.f32 %v2492, %v2492
    %v2495 = vsel %vm87, %v2493, 0.0
    %2496 = vadd.xlane.f32.xlu0 %v2495
    %v2497 = vpop.xlane.xlu0 %2496
    %v2498 = vsel %vm87, %v2494, 0.0
    %2499 = vadd.xlane.f32.xlu0 %v2498
    %v2500 = vpop.xlane.xlu0 %2499
    %v2501 = vmax.f32 %v2497, 1e-12
    %v2502 = vmax.f32 %v2500, 1e-12
    %v2503 = vrsqrt.pop %v2501
    %v2504 = vrsqrt.pop %v2502
    %v2505 = vmul.f32 %v2491, %v2503
    %v2506 = vmul.f32 %v2492, %v2504
    %v2508 = vsel %vm87, %v2505, 0
    %v2511 = vsel %vm87, %v2506, 0
    %2513 = vmatprep.subr.mxu0 0.0
    %2514 = vmatpush1.msra.mxu0 %v46
    %2515 = vmatprep.subr.mxu0 0.0
    %2516 = vmatpush1.msra.mxu0 %v47
    %2517 = vmatprep.subr.mxu0 0.0
    %2518 = vmatpush1.msra.mxu0 %v48
    %2519 = vmatprep.subr.mxu0 0.0
    %2520 = vmatpush1.msra.mxu0 %v49
    %2521 = vmatprep.subr.mxu0 0.0
    %2522 = vmatpush1.msra.mxu0 0.0
    %2523 = vmatprep.subr.mxu0 0.0
    %2524 = vmatpush1.msra.mxu0 0.0
    %2525 = vmatprep.subr.mxu0 0.0
    %2526 = vmatpush1.msra.mxu0 0.0
    %2527 = vmatprep.subr.mxu0 0.0
    %2528 = vmatpush1.msra.mxu0 0.0
    %2529 = vmatprep.subr.mxu0 0.0
    %2530 = vmatpush1.msra.mxu0 0.0
    %2531 = vmatprep.subr.mxu0 0.0
    %2532 = vmatpush1.msra.mxu0 0.0
    %2533 = vmatprep.subr.mxu0 0.0
    %2534 = vmatpush1.msra.mxu0 0.0
    %2535 = vmatprep.subr.mxu0 0.0
    %2536 = vmatpush1.msra.mxu0 0.0
    %2537 = vmatprep.subr.mxu0 0.0
    %2538 = vmatpush1.msra.mxu0 0.0
    %2539 = vmatprep.subr.mxu0 0.0
    %2540 = vmatpush1.msra.mxu0 0.0
    %2541 = vmatprep.subr.mxu0 0.0
    %2542 = vmatpush1.msra.mxu0 0.0
    %2543 = vmatprep.subr.mxu0 0.0
    %2544 = vmatpush1.msra.mxu0 0.0
    %2545 = vmatprep.subr.mxu0 0.0
    %2546 = vmatpush1.msra.mxu0 0.0
    %2547 = vmatprep.subr.mxu0 0.0
    %2548 = vmatpush1.msra.mxu0 0.0
    %2549 = vmatprep.subr.mxu0 0.0
    %2550 = vmatpush1.msra.mxu0 0.0
    %2551 = vmatprep.subr.mxu0 0.0
    %2552 = vmatpush1.msra.mxu0 0.0
    %2553 = vmatprep.subr.mxu0 0.0
    %2554 = vmatpush1.msra.mxu0 0.0
    %2555 = vmatprep.subr.mxu0 0.0
    %2556 = vmatpush1.msra.mxu0 0.0
    %2557 = vmatprep.subr.mxu0 0.0
    %2558 = vmatpush1.msra.mxu0 0.0
    %2559 = vmatprep.subr.mxu0 0.0
    %2560 = vmatpush1.msra.mxu0 0.0
    %2561 = vmatprep.subr.mxu0 0.0
    %2562 = vmatpush1.msra.mxu0 0.0
    %2563 = vmatprep.subr.mxu0 0.0
    %2564 = vmatpush1.msra.mxu0 0.0
    %2565 = vmatprep.subr.mxu0 0.0
    %2566 = vmatpush1.msra.mxu0 0.0
    %2567 = vmatprep.subr.mxu0 0.0
    %2568 = vmatpush1.msra.mxu0 0.0
    %2569 = vmatprep.subr.mxu0 0.0
    %2570 = vmatpush1.msra.mxu0 0.0
    %2571 = vmatprep.subr.mxu0 0.0
    %2572 = vmatpush1.msra.mxu0 0.0
    %2573 = vmatprep.subr.mxu0 0.0
    %2574 = vmatpush1.msra.mxu0 0.0
    %2575 = vmatprep.subr.mxu0 0.0
    %2576 = vmatpush1.msra.mxu0 0.0
    %2577 = vmatprep.mubr.f32.mxu0 0.0
    %2578 = vmatmul.mubr.f32.gmra.mrb[0].mxu0 %v2508
    %v2579 = vpop.f32.mrb[0].mxu0
    %v2580 = vadd.f32 0.0, %v2579
    %v2581 = vpop.f32.mrb[0].mxu0
    %2582 = vmatprep.mubr.f32.mxu0 0.0
    %2583 = vmatmul.mubr.f32.gmra.mrb[0].mxu0 %v2511
    %v2584 = vpop.f32.mrb[0].mxu0
    %v2585 = vadd.f32 0.0, %v2584
    %v2586 = vpop.f32.mrb[0].mxu0
    %2587 = vdwg.mxu0
    %v2588 = vxor.u32 %v2580, 2147483648
    %v2589 = vxor.u32 %v2585, 2147483648
    %v2590 = vmul.f32 %v2588, 1.442695
    %v2591 = vpow.pop %v2590
    %v2592 = vmul.f32 %v2589, 1.442695
    %v2593 = vpow.pop %v2592
    %v2594 = vadd.f32 %v2591, 1.0
    %v2595 = vadd.f32 %v2593, 1.0
    %v2596 = vrcp.pop %v2594
    %v2597 = vmul.f32 1.0, %v2596
    %v2598 = vrcp.pop %v2595
    %v2599 = vmul.f32 1.0, %v2598
    %v2600 = vmul.f32 %v2580, %v2597
    %v2601 = vmul.f32 %v2585, %v2599
    %2604 = vrot.lane.b32.xlu0 %v2600, 64
    %v2605 = vpop.permute.xlu0 %2604
    %2606 = vrot.lane.b32.xlu0 %v2601, 64
    %v2607 = vpop.permute.xlu0 %2606
    %v2610 = vmul.f32 %v2580, %v2605
    %v2611 = vmul.f32 %v2585, %v2607
    %v2613 = vsel %vm171, %v2610, 0
    %v2616 = vsel %vm171, %v2611, 0
    %2618 = vmatprep.subr.mxu0 0.0
    %2619 = vmatpush1.msra.mxu0 %v58
    %2620 = vmatprep.subr.mxu0 0.0
    %2621 = vmatpush1.msra.mxu0 %v59
    %2622 = vmatprep.subr.mxu0 0.0
    %2623 = vmatpush1.msra.mxu0 %v60
    %2624 = vmatprep.subr.mxu0 0.0
    %2625 = vmatpush1.msra.mxu0 %v61
    %2626 = vmatprep.subr.mxu0 0.0
    %2627 = vmatpush1.msra.mxu0 %v62
    %2628 = vmatprep.subr.mxu0 0.0
    %2629 = vmatpush1.msra.mxu0 %v63
    %2630 = vmatprep.subr.mxu0 0.0
    %2631 = vmatpush1.msra.mxu0 %v64
    %2632 = vmatprep.subr.mxu0 0.0
    %2633 = vmatpush1.msra.mxu0 %v65
    %2634 = vmatprep.subr.mxu0 0.0
    %2635 = vmatpush1.msra.mxu0 0.0
    %2636 = vmatprep.subr.mxu0 0.0
    %2637 = vmatpush1.msra.mxu0 0.0
    %2638 = vmatprep.subr.mxu0 0.0
    %2639 = vmatpush1.msra.mxu0 0.0
    %2640 = vmatprep.subr.mxu0 0.0
    %2641 = vmatpush1.msra.mxu0 0.0
    %2642 = vmatprep.subr.mxu0 0.0
    %2643 = vmatpush1.msra.mxu0 0.0
    %2644 = vmatprep.subr.mxu0 0.0
    %2645 = vmatpush1.msra.mxu0 0.0
    %2646 = vmatprep.subr.mxu0 0.0
    %2647 = vmatpush1.msra.mxu0 0.0
    %2648 = vmatprep.subr.mxu0 0.0
    %2649 = vmatpush1.msra.mxu0 0.0
    %2650 = vmatprep.subr.mxu0 0.0
    %2651 = vmatpush1.msra.mxu0 0.0
    %2652 = vmatprep.subr.mxu0 0.0
    %2653 = vmatpush1.msra.mxu0 0.0
    %2654 = vmatprep.subr.mxu0 0.0
    %2655 = vmatpush1.msra.mxu0 0.0
    %2656 = vmatprep.subr.mxu0 0.0
    %2657 = vmatpush1.msra.mxu0 0.0
    %2658 = vmatprep.subr.mxu0 0.0
    %2659 = vmatpush1.msra.mxu0 0.0
    %2660 = vmatprep.subr.mxu0 0.0
    %2661 = vmatpush1.msra.mxu0 0.0
    %2662 = vmatprep.subr.mxu0 0.0
    %2663 = vmatpush1.msra.mxu0 0.0
    %2664 = vmatprep.subr.mxu0 0.0
    %2665 = vmatpush1.msra.mxu0 0.0
    %2666 = vmatprep.subr.mxu0 0.0
    %2667 = vmatpush1.msra.mxu0 0.0
    %2668 = vmatprep.subr.mxu0 0.0
    %2669 = vmatpush1.msra.mxu0 0.0
    %2670 = vmatprep.subr.mxu0 0.0
    %2671 = vmatpush1.msra.mxu0 0.0
    %2672 = vmatprep.subr.mxu0 0.0
    %2673 = vmatpush1.msra.mxu0 0.0
    %2674 = vmatprep.subr.mxu0 0.0
    %2675 = vmatpush1.msra.mxu0 0.0
    %2676 = vmatprep.subr.mxu0 0.0
    %2677 = vmatpush1.msra.mxu0 0.0
    %2678 = vmatprep.subr.mxu0 0.0
    %2679 = vmatpush1.msra.mxu0 0.0
    %2680 = vmatprep.subr.mxu0 0.0
    %2681 = vmatpush1.msra.mxu0 0.0
    %2682 = vmatprep.mubr.f32.mxu0 0.0
    %2683 = vmatmul.mubr.f32.gmra.mrb[0].mxu0 %v2613
    %v2684 = vpop.f32.mrb[0].mxu0
    %v2685 = vadd.f32 0.0, %v2684
    %v2686 = vpop.f32.mrb[0].mxu0
    %2687 = vmatprep.mubr.f32.mxu0 0.0
    %2688 = vmatmul.mubr.f32.gmra.mrb[0].mxu0 %v2616
    %v2689 = vpop.f32.mrb[0].mxu0
    %v2690 = vadd.f32 0.0, %v2689
    %v2691 = vpop.f32.mrb[0].mxu0
    %2692 = vdwg.mxu0
    %v2693 = vmul.f32 %v2685, %v2685
    %v2694 = vmul.f32 %v2690, %v2690
    %v2695 = vsel %vm87, %v2693, 0.0
    %2696 = vadd.xlane.f32.xlu0 %v2695
    %v2697 = vpop.xlane.xlu0 %2696
    %v2698 = vsel %vm87, %v2694, 0.0
    %2699 = vadd.xlane.f32.xlu0 %v2698
    %v2700 = vpop.xlane.xlu0 %2699
    %v2701 = vmax.f32 %v2697, 1e-12
    %v2702 = vmax.f32 %v2700, 1e-12
    %v2703 = vrsqrt.pop %v2701
    %v2704 = vrsqrt.pop %v2702
    %v2705 = vmul.f32 %v2685, %v2703
    %v2706 = vmul.f32 %v2690, %v2704
    %v2707 = vsub.f32 %v2705, %v2505
    %v2708 = vsub.f32 %v2706, %v2506
    %v2709 = vlaneseq
    %v2710 = vshrl.u32 %v2709, 7
    %v2711 = vsub.s32 0, %v2710
    %v2712 = vrot.slane %v86, %v2711
    %v2713 = vmul.f32 %v2712, %v2707
    %v2714 = vmul.f32 %v2712, %v2708
    %v2715 = vadd.f32 %v2505, %v2713
    %v2716 = vadd.f32 %v2506, %v2714
    %v2717 = vmul.f32 %v2715, %v2715
    %v2718 = vmul.f32 %v2716, %v2716
    %v2719 = vsel %vm87, %v2717, 0.0
    %2720 = vadd.xlane.f32.xlu0 %v2719
    %v2721 = vpop.xlane.xlu0 %2720
    %v2722 = vsel %vm87, %v2718, 0.0
    %2723 = vadd.xlane.f32.xlu0 %v2722
    %v2724 = vpop.xlane.xlu0 %2723
    %v2725 = vmax.f32 %v2721, 1e-12
    %v2726 = vmax.f32 %v2724, 1e-12
    %v2727 = vrsqrt.pop %v2725
    %v2728 = vrsqrt.pop %v2726
    %v2729 = vmul.f32 %v2715, %v2727
    %v2730 = vmul.f32 %v2716, %v2728
    %2731 = vst.msk [vmem:[#allocation7] sm:$0xff] %vm87, %v2729
    %2732 = vst.msk [vmem:[#allocation7 + $0x8] sm:$0xff] %vm87, %v2730
    // Predicated region
    $region18: #{layer_forward.1} parent=1 // pred_check
      _
    $region19: #{layer_forward.1} parent=1 // pred_check_branch
      %2734 = sbr.rel (0) target = $region21
    $region20: #{layer_forward.1} parent=1 // pred_region
      %s2736 = ssub.s32 256, 256
      %2737 = vsyncadd [#allocation4], %s2736
      %s2738 = sshll.u32 [#allocation7], 4
      %s2739 = int_to_ptr.vmem [resolvable:$true] %s2738
      %2744 = dma.vmem_to_hbm [thread:$0]  %s2739, 256, %s2, [#allocation4], 128, 128, 8
    $region21: #{layer_forward.1} parent=1 // pred_fallthru
      _
    // Predicated region
    $region22: #{layer_forward.1} parent=1 // pred_check
      _
    $region23: #{layer_forward.1} parent=1 // pred_check_branch
      %2746 = sbr.rel (0) target = $region25
    $region24: #{layer_forward.1} parent=1 // pred_region
      %2747 = dma.done [#allocation4], 256
    $region25: #{layer_forward.1} parent=1 // pred_fallthru
      _
    %2748 = vsyncpa [#allocation3], 1
    %2749 = vsyncpa [#allocation6], 1
    %2750 = vsyncpa [#allocation4], 1

</llo_original>
